<compile_context>
chip_gen: v7x
topology: tpu7x:2x2x1
jax: 0.10.0
libtpu: 0.0.40
codegen_flags: <defaults>
</compile_context>

<pallas_src>
import numpy as np

import jax
import jax.numpy as jnp
from jax import lax
from jax.experimental import pallas as pl
from jax.experimental.pallas import tpu as pltpu

BN_EPS = 1e-5
LANE = 128


# -----------------------------------------------------------------------------
# Host-side parameter packing (all weight plumbing hoisted out of the forward)
# -----------------------------------------------------------------------------
def _dense_grouped_weight(w, groups):
    """(Cout, Cin//groups, kH, kW) grouped weight -> dense (Cout, Cin, kH, kW)."""
    w = np.asarray(w, np.float32)
    cout, cpg, kh, kw = w.shape
    cin = cpg * groups
    opg = cout // groups
    full = np.zeros((cout, cin, kh, kw), np.float32)
    for g in range(groups):
        full[g * opg:(g + 1) * opg, g * cpg:(g + 1) * cpg] = w[g * opg:(g + 1) * opg]
    return full


def _fold_bn(p):
    gamma = np.asarray(p['gamma'], np.float32)
    var = np.asarray(p['var'], np.float32)
    beta = np.asarray(p['beta'], np.float32)
    mean = np.asarray(p['mean'], np.float32)
    bias = np.asarray(p['b'], np.float32)
    scale = gamma / np.sqrt(var + BN_EPS)
    shift = beta + (bias - mean) * scale
    return scale, shift


def _pack_conv3x3(p, groups, cout):
    """Conv+BN folded into one tap-major (cout, 9*cin) weight and a (cout, 1) shift."""
    wfull = _dense_grouped_weight(p['w'], groups)            # (cout, cin, 3, 3)
    scale, shift = _fold_bn(p)
    taps = [scale[:, None] * wfull[:, :, t // 3, t % 3] for t in range(9)]
    return np.concatenate(taps, axis=1), shift.reshape(cout, 1)


def _tap_masks(B, H, W):
    """(9, B*H*W) 0/1 masks killing out-of-bounds / wrapped taps of a pad-1 3x3 conv."""
    L = B * H * W
    m = np.zeros((9, L), np.float32)
    for t in range(9):
        dh, dw = t // 3, t % 3
        for b in range(B):
            for h in range(H):
                for w in range(W):
                    if 0 <= h + dh - 1 < H and 0 <= w + dw - 1 < W:
                        m[t, b * H * W + h * W + w] = 1.0
    return m


class _Packer:
    """Packs every constant into ONE (rows, 128) f32 slab -> a single input DMA."""

    def __init__(self, width):
        self.width = width
        self.chunks = []
        self.index = {}
        self.rows = 0

    def add(self, name, arr):
        arr = np.asarray(arr, np.float32)
        if arr.ndim == 1:
            arr = arr.reshape(-1, 1)
        r, c = arr.shape
        assert c <= self.width, (name, arr.shape)
        rp = -(-r // 8) * 8                                  # 8-sublane aligned starts
        buf = np.zeros((rp, self.width), np.float32)
        buf[:r, :c] = arr
        self.chunks.append(buf)
        self.index[name] = (self.rows, r, c)
        self.rows += rp

    def finish(self):
        return np.concatenate(self.chunks, axis=0), self.index


def pack_attention(params, *, B, cin, cout, H, W, groups=3):
    Ho = (H + 2 - 3) // 2 + 1                                # stride-2, pad-1, 3x3
    Wo = (W + 2 - 3) // 2 + 1
    HW, L = Ho * Wo, B * Ho * Wo
    assert L <= LANE and 9 * cout <= LANE and 9 * cin <= LANE, \
        "toy-size packing; tile the lane axis on a grid for larger shapes"

    pk = _Packer(LANE)
    # Tap mask replicated per source channel -> one (9*cout, L) VPU multiply per conv.
    pk.add('mask9c', np.repeat(_tap_masks(B, Ho, Wo), cout, axis=0))

    def add_block(pfx, p, g, has_conv3):
        assert tuple(np.asarray(p['ta_dw1']).shape[2:]) == (Ho, Wo)
        w1, b1 = _pack_conv3x3(p['conv1'], g, cout)
        w2, b2 = _pack_conv3x3(p['conv2'], g, cout)
        pk.add(pfx + 'w1', w1)
        pk.add(pfx + 'b1', b1)
        pk.add(pfx + 'w2', w2)
        pk.add(pfx + 'b2', b2)
        pk.add(pfx + 'dw1', np.asarray(p['ta_dw1'], np.float32).reshape(cout, HW))
        pk.add(pfx + 'dw2', np.asarray(p['ta_dw2'], np.float32).reshape(cout, HW))
        pk.add(pfx + 'wm1', _dense_grouped_weight(p['ta_mlp1'], g)[:, :, 0, 0])
        pk.add(pfx + 'wm2', _dense_grouped_weight(p['ta_mlp2'], g)[:, :, 0, 0])
        pk.add(pfx + 'ws', sum(_dense_grouped_weight(w, g)[:, :, 0, 0] for w in p['sa_w']))
        if has_conv3:
            s3, sh3 = _fold_bn(p['conv3'])
            w3 = _dense_grouped_weight(p['conv3']['w'], g)[:, :, 0, 0]
            pk.add(pfx + 'w3', s3[:, None] * w3)
            pk.add(pfx + 'b3', sh3.reshape(cout, 1))

    add_block('d_', params['DRAM'], groups, True)
    add_block('r1_', params['RAM1'], groups, False)
    add_block('r2_', params['RAM2'], 1, False)

    slab, index = pk.finish()
    meta = dict(B=B, cin=cin, cout=cout, H=H, W=W, Ho=Ho, Wo=Wo, HW=HW, L=L,
                groups=groups, index=index)
    return jnp.asarray(slab), meta


# -----------------------------------------------------------------------------
# Single fused Pallas kernel: DRAM -> RAM1 -> RAM2
# -----------------------------------------------------------------------------
def _build_kernel(meta):
    B, HW, L = meta['B'], meta['HW'], meta['L']
    Wo = meta['Wo']
    cin, cout, groups = meta['cin'], meta['cout'], meta['groups']
    index = meta['index']

    def kernel(xt_ref, c_ref, o_ref):
        def get(name):                                       # static slab slice -> view
            r0, nr, nc = index[name]
            return c_ref[pl.ds(r0, nr), pl.ds(0, nc)]

        tap_mask = get('mask9c')                             # (9*cout, L)

        def lane_shift(v, off):
            # out[:, l] = v[:, (l + off) % L]; wrapped lanes are zeroed by tap_mask.
            k = off % L
            if k == 0:
                return v
            return jnp.concatenate([v[:, k:], v[:, :k]], axis=1)

        def conv3x3_s1(src, w_name, b_name):
            # stride-1 / pad-1 3x3 conv on the resident (cout, L) slab:
            # 9 lane rotations -> one boundary-mask multiply -> ONE K=9*cout matmul.
            taps = [lane_shift(src, (t // 3 - 1) * Wo + (t % 3 - 1)) for t in range(9)]
            stacked = jnp.concatenate(taps, axis=0) * tap_mask          # (9*cout, L)
            y = jnp.dot(get(w_name), stacked,
                        preferred_element_type=jnp.float32) + get(b_name)
            return jnp.maximum(y, 0.0)

        def ta3(y, pfx):
            # Channel attention. Per-batch depthwise reductions stay on the XLU;
            # the shared MLP runs once on the (cout, 2B) stacked columns.
            dw1, dw2 = get(pfx + 'dw1'), get(pfx + 'dw2')               # (cout, HW)
            wm1, wm2 = get(pfx + 'wm1'), get(pfx + 'wm2')
            ybs = [y[:, b * HW:(b + 1) * HW] for b in range(B)]
            v = jnp.concatenate(
                [jnp.sum(yb * dw1, axis=-1, keepdims=True) for yb in ybs]
                + [jnp.sum(yb * dw2, axis=-1, keepdims=True) for yb in ybs],
                axis=-1)                                                # (cout, 2B)
            h = jnp.maximum(jnp.dot(wm1, v, preferred_element_type=jnp.float32), 0.0)
            m = jnp.dot(wm2, h, preferred_element_type=jnp.float32)     # (cout, 2B)
            # PyTorch source reuses c_weight2 for "weight3": MLP(v1) + 2*MLP(v2).
            gate = jax.nn.sigmoid(m[:, 0:B] + 2.0 * m[:, B:2 * B])      # (cout, B)
            return jnp.concatenate(
                [ybs[b] * gate[:, b:b + 1] for b in range(B)], axis=-1)

        def sa3(y, pfx, g):
            # Spatial attention; group gate expanded by sublane broadcast (no matmul).
            a = jax.nn.sigmoid(
                jnp.dot(get(pfx + 'ws'), y, preferred_element_type=jnp.float32))  # (g, L)
            if g == 1:
                return y * a
            cpg = cout // g
            return jnp.concatenate(
                [y[i * cpg:(i + 1) * cpg, :] * a[i:i + 1, :] for i in range(g)], axis=0)

        # ---------------- DRAM (stride-2 entry block, 1x1-conv residual) ------
        xt = xt_ref[...]                                                # (9*cin, L)
        y = jnp.maximum(
            jnp.dot(get('d_w1'), xt, preferred_element_type=jnp.float32)
            + get('d_b1'), 0.0)                                         # conv1+BN+ReLU
        y = conv3x3_s1(y, 'd_w2', 'd_b2')                               # conv2+BN+ReLU
        y = sa3(ta3(y, 'd_'), 'd_', groups)
        res = jnp.maximum(
            jnp.dot(get('d_w3'), xt[4 * cin:5 * cin, :],                # centre tap == x[::2, ::2]
                    preferred_element_type=jnp.float32) + get('d_b3'), 0.0)
        slab = y + res

        # ---------------- RAM1 (groups=3, identity residual) ------------------
        y = conv3x3_s1(slab, 'r1_w1', 'r1_b1')
        y = conv3x3_s1(y, 'r1_w2', 'r1_b2')
        slab = sa3(ta3(y, 'r1_'), 'r1_', groups) + slab

        # ---------------- RAM2 (groups=1, identity residual) ------------------
        y = conv3x3_s1(slab, 'r2_w1', 'r2_b1')
        y = conv3x3_s1(y, 'r2_w2', 'r2_b2')
        o_ref[...] = sa3(ta3(y, 'r2_'), 'r2_', 1) + slab                # lane-dense store

    return kernel


def build_forward(const_slab, meta):
    B, cin = meta['B'], meta['cin']
    Ho, Wo, L, cout = meta['Ho'], meta['Wo'], meta['L'], meta['cout']
    kernel = _build_kernel(meta)
    vmem = pl.BlockSpec(memory_space=pltpu.MemorySpace.VMEM)

    @jax.jit
    def forward(x, consts):
        # Tap-major patches for the single stride-2 entry conv. x is tiny, so this
        # XLA-side slicing (~27 KB) replaces all in-kernel 0/1 gather matrices.
        xp = jnp.pad(x, ((0, 0), (0, 0), (1, 1), (1, 1)))
        taps = []
        for dh in range(3):
            for dw in range(3):
                patch = xp[:, :, dh:dh + 2 * Ho - 1:2, dw:dw + 2 * Wo - 1:2]
                taps.append(jnp.transpose(patch, (1, 0, 2, 3)).reshape(cin, L))
        x_taps = jnp.concatenate(taps, axis=0)                          # (9*cin, L)

        out = pl.pallas_call(
            kernel,
            out_shape=jax.ShapeDtypeStruct((cout, L), jnp.float32),
            in_specs=[vmem, vmem],
            out_specs=vmem,
        )(x_taps, consts)
        return out.reshape(cout, B, Ho, Wo).transpose(1, 0, 2, 3)

    return lambda x: forward(x, const_slab)


# -----------------------------------------------------------------------------
# Deterministic parameter construction
# -----------------------------------------------------------------------------
def _init_conv_bn(key, cin, cout, kh, kw, groups):
    k = jax.random.split(key, 6)
    return dict(
        w=jax.random.normal(k[0], (cout, cin // groups, kh, kw), jnp.float32) * 0.2,
        b=jax.random.normal(k[5], (cout,), jnp.float32) * 0.1,
        gamma=jax.random.uniform(k[1], (cout,), jnp.float32, 0.5, 1.5),
        beta=jax.random.normal(k[2], (cout,), jnp.float32) * 0.1,
        mean=jax.random.normal(k[3], (cout,), jnp.float32) * 0.1,
        var=jax.random.uniform(k[4], (cout,), jnp.float32, 0.5, 1.5),
    )


def _init_ram(key, cin, cout, groups, fh, fw, use_1x1conv, ratio=9):
    keys = jax.random.split(key, 12)
    hid = cout // ratio * 3
    p = {
        'conv1': _init_conv_bn(keys[0], cin, cout, 3, 3, groups),
        'conv2': _init_conv_bn(keys[1], cout, cout, 3, 3, groups),
        'ta_dw1': jax.random.normal(keys[2], (cout, 1, fh, fw), jnp.float32) * 0.2,
        'ta_dw2': jax.random.normal(keys[3], (cout, 1, fh, fw), jnp.float32) * 0.2,
        'ta_mlp1': jax.random.normal(keys[4], (hid, cout // groups, 1, 1), jnp.float32) * 0.3,
        'ta_mlp2': jax.random.normal(keys[5], (cout, hid // groups, 1, 1), jnp.float32) * 0.3,
    }
    n_sa = 3 if groups == 3 else 2   # groups != 3 path only uses s_weight1 + s_weight2
    p['sa_w'] = [jax.random.normal(keys[6 + i], (groups, cout // groups, 1, 1),
                                   jnp.float32) * 0.3 for i in range(n_sa)]
    if use_1x1conv:
        p['conv3'] = _init_conv_bn(keys[10], cin, cout, 1, 1, groups)
    return p


def init_attention(key, cin, cout, feature_size, groups=3):
    k1, k2, k3 = jax.random.split(key, 3)
    fh, fw = feature_size
    return {
        'DRAM': _init_ram(k1, cin, cout, groups, fh, fw, True),
        'RAM1': _init_ram(k2, cout, cout, groups, fh, fw, False),
        'RAM2': _init_ram(k3, cout, cout, 1, fh, fw, False),
    }


# -----------------------------------------------------------------------------
# Pure-JAX reference (lax.conv) for correctness checking
# -----------------------------------------------------------------------------
def _ref_conv(x, w, stride, pad, groups, b=None):
    y = lax.conv_general_dilated(
        x, w, window_strides=stride, padding=[(pad, pad), (pad, pad)],
        dimension_numbers=('NCHW', 'OIHW', 'NCHW'), feature_group_count=groups)
    if b is not None:
        y = y + b.reshape(1, -1, 1, 1)
    return y


def _ref_conv_bn_relu(x, p, stride, pad, groups):
    y = _ref_conv(x, p['w'], stride, pad, groups, p['b'])
    inv = p['gamma'] / jnp.sqrt(p['var'] + BN_EPS)
    y = y * inv.reshape(1, -1, 1, 1) + (p['beta'] - p['mean'] * inv).reshape(1, -1, 1, 1)
    return jnp.maximum(y, 0.0)


def _ref_ta3(x, p, groups):
    C = x.shape[1]

    def mlp(v):
        h = jnp.maximum(_ref_conv(v, p['ta_mlp1'], (1, 1), 0, groups), 0.0)
        return _ref_conv(h, p['ta_mlp2'], (1, 1), 0, groups)

    m1 = mlp(_ref_conv(x, p['ta_dw1'], (1, 1), 0, C))
    m2 = mlp(_ref_conv(x, p['ta_dw2'], (1, 1), 0, C))
    return jax.nn.sigmoid(m1 + 2.0 * m2) * x   # weight3 reuses c_weight2


def _ref_sa3(x, p, groups):
    C = x.shape[1]
    cpg = C // groups
    a = jax.nn.sigmoid(sum(_ref_conv(x, w, (1, 1), 0, groups) for w in p['sa_w']))
    if groups == 3:
        return jnp.concatenate(
            [x[:, g * cpg:(g + 1) * cpg] * a[:, g:g + 1] for g in range(3)], axis=1)
    return a * x


def _ref_ram3(x, p, groups, stride, use_1x1conv):
    out = _ref_conv_bn_relu(x, p['conv1'], stride, 1, groups)
    out = _ref_conv_bn_relu(out, p['conv2'], (1, 1), 1, groups)
    out = _ref_ta3(out, p, groups)
    out = _ref_sa3(out, p, groups)
    res = _ref_conv_bn_relu(x, p['conv3'], stride, 0, groups) if use_1x1conv else x
    return out + res


def _ref_attention_module3(x, params):
    out = _ref_ram3(x, params['DRAM'], 3, (2, 2), True)
    out = _ref_ram3(out, params['RAM1'], 3, (1, 1), False)
    out = _ref_ram3(out, params['RAM2'], 1, (1, 1), False)
    return out


# -----------------------------------------------------------------------------
if __name__ == "__main__":
    key = jax.random.PRNGKey(0)
    kx, kp = jax.random.split(key)

    B, Cin, H, W = 2, 6, 16, 16
    Cout = 9                       # divisible by groups=3 and >= ratio(9)
    feature_size = (8, 8)          # spatial size after the stride-2 DRAM conv

    x = jax.random.normal(kx, (B, Cin, H, W), jnp.float32)
    params = init_attention(kp, Cin, Cout, feature_size, groups=3)

    const_slab, meta = pack_attention(params, B=B, cin=Cin, cout=Cout, H=H, W=W, groups=3)
    fwd = build_forward(const_slab, meta)

    out = jax.block_until_ready(fwd(x))

    ref = _ref_attention_module3(x, params)
    err = float(jnp.max(jnp.abs(out - ref)))
    assert out.shape == (B, Cout, 8, 8), out.shape
    assert err < 2e-3, f"mismatch vs reference: {err}"
    print("KERNEL_OK")
</pallas_src>

<mosaic_0001>
module attributes {stable_mosaic.version = 11 : i64} {
  func.func @kernel(%arg0: memref<54x128xf32, #tpu.memory_space<vmem>>, %arg1: memref<504x128xf32, #tpu.memory_space<vmem>>, %arg2: memref<9x128xf32, #tpu.memory_space<vmem>>) attributes {dimension_semantics = [], scalar_prefetch = 0 : i64, scratch_operands = 0 : i64, tpu.core_type = #tpu.core_type<tc>} {
    %c0 = arith.constant 0 : index
    %c0_0 = arith.constant 0 : index
    %0 = vector.load %arg1[%c0, %c0_0] : memref<504x128xf32, #tpu.memory_space<vmem>>, vector<81x128xf32>
    %c0_1 = arith.constant 0 : index
    %c0_2 = arith.constant 0 : index
    %1 = vector.load %arg0[%c0_1, %c0_2] : memref<54x128xf32, #tpu.memory_space<vmem>>, vector<54x128xf32>
    %c88 = arith.constant 88 : index
    %c0_3 = arith.constant 0 : index
    %2 = vector.load %arg1[%c88, %c0_3] : memref<504x128xf32, #tpu.memory_space<vmem>>, vector<9x54xf32>
    %cst = arith.constant dense<0.000000e+00> : vector<9x128xf32>
    %3 = tpu.matmul %2, %1, %cst {dimension_numbers = #tpu.dot_dimension_numbers<[1], [0], [0], [1], [0, 0, 1, 1], [], []>} : vector<9x54xf32>, vector<54x128xf32>, vector<9x128xf32> -> vector<9x128xf32>
    %c104 = arith.constant 104 : index
    %c0_4 = arith.constant 0 : index
    %4 = vector.load %arg1[%c104, %c0_4] : memref<504x128xf32, #tpu.memory_space<vmem>>, vector<9x1xf32>
    %5 = vector.broadcast %4 : vector<9x1xf32> to vector<9x128xf32>
    %6 = arith.addf %3, %5 : vector<9x128xf32>
    %cst_5 = arith.constant 0.000000e+00 : f32
    %7 = vector.broadcast %cst_5 : f32 to vector<9x128xf32>
    %8 = arith.maximumf %6, %7 : vector<9x128xf32>
    %9 = vector.extract_strided_slice %8 {offsets = [0, 119], sizes = [9, 9], strides = [1, 1]} : vector<9x128xf32> to vector<9x9xf32>
    %10 = vector.extract_strided_slice %8 {offsets = [0, 0], sizes = [9, 119], strides = [1, 1]} : vector<9x128xf32> to vector<9x119xf32>
    %11 = tpu.concatenate %9, %10 in 1 : vector<9x9xf32>, vector<9x119xf32> -> vector<9x128xf32>
    %12 = vector.extract_strided_slice %8 {offsets = [0, 120], sizes = [9, 8], strides = [1, 1]} : vector<9x128xf32> to vector<9x8xf32>
    %13 = vector.extract_strided_slice %8 {offsets = [0, 0], sizes = [9, 120], strides = [1, 1]} : vector<9x128xf32> to vector<9x120xf32>
    %14 = tpu.concatenate %12, %13 in 1 : vector<9x8xf32>, vector<9x120xf32> -> vector<9x128xf32>
    %15 = vector.extract_strided_slice %8 {offsets = [0, 121], sizes = [9, 7], strides = [1, 1]} : vector<9x128xf32> to vector<9x7xf32>
    %16 = vector.extract_strided_slice %8 {offsets = [0, 0], sizes = [9, 121], strides = [1, 1]} : vector<9x128xf32> to vector<9x121xf32>
    %17 = tpu.concatenate %15, %16 in 1 : vector<9x7xf32>, vector<9x121xf32> -> vector<9x128xf32>
    %18 = vector.extract_strided_slice %8 {offsets = [0, 127], sizes = [9, 1], strides = [1, 1]} : vector<9x128xf32> to vector<9x1xf32>
    %19 = vector.extract_strided_slice %8 {offsets = [0, 0], sizes = [9, 127], strides = [1, 1]} : vector<9x128xf32> to vector<9x127xf32>
    %20 = tpu.concatenate %18, %19 in 1 : vector<9x1xf32>, vector<9x127xf32> -> vector<9x128xf32>
    %21 = vector.extract_strided_slice %8 {offsets = [0, 1], sizes = [9, 127], strides = [1, 1]} : vector<9x128xf32> to vector<9x127xf32>
    %22 = vector.extract_strided_slice %8 {offsets = [0, 0], sizes = [9, 1], strides = [1, 1]} : vector<9x128xf32> to vector<9x1xf32>
    %23 = tpu.concatenate %21, %22 in 1 : vector<9x127xf32>, vector<9x1xf32> -> vector<9x128xf32>
    %24 = vector.extract_strided_slice %8 {offsets = [0, 7], sizes = [9, 121], strides = [1, 1]} : vector<9x128xf32> to vector<9x121xf32>
    %25 = vector.extract_strided_slice %8 {offsets = [0, 0], sizes = [9, 7], strides = [1, 1]} : vector<9x128xf32> to vector<9x7xf32>
    %26 = tpu.concatenate %24, %25 in 1 : vector<9x121xf32>, vector<9x7xf32> -> vector<9x128xf32>
    %27 = vector.extract_strided_slice %8 {offsets = [0, 8], sizes = [9, 120], strides = [1, 1]} : vector<9x128xf32> to vector<9x120xf32>
    %28 = vector.extract_strided_slice %8 {offsets = [0, 0], sizes = [9, 8], strides = [1, 1]} : vector<9x128xf32> to vector<9x8xf32>
    %29 = tpu.concatenate %27, %28 in 1 : vector<9x120xf32>, vector<9x8xf32> -> vector<9x128xf32>
    %30 = vector.extract_strided_slice %8 {offsets = [0, 9], sizes = [9, 119], strides = [1, 1]} : vector<9x128xf32> to vector<9x119xf32>
    %31 = vector.extract_strided_slice %8 {offsets = [0, 0], sizes = [9, 9], strides = [1, 1]} : vector<9x128xf32> to vector<9x9xf32>
    %32 = tpu.concatenate %30, %31 in 1 : vector<9x119xf32>, vector<9x9xf32> -> vector<9x128xf32>
    %33 = tpu.concatenate %11, %14, %17, %20, %8, %23, %26, %29, %32 in 0 : vector<9x128xf32>, vector<9x128xf32>, vector<9x128xf32>, vector<9x128xf32>, vector<9x128xf32>, vector<9x128xf32>, vector<9x128xf32>, vector<9x128xf32>, vector<9x128xf32> -> vector<81x128xf32>
    %34 = arith.mulf %33, %0 : vector<81x128xf32>
    %c120 = arith.constant 120 : index
    %c0_6 = arith.constant 0 : index
    %35 = vector.load %arg1[%c120, %c0_6] : memref<504x128xf32, #tpu.memory_space<vmem>>, vector<9x81xf32>
    %cst_7 = arith.constant dense<0.000000e+00> : vector<9x128xf32>
    %36 = tpu.matmul %35, %34, %cst_7 {dimension_numbers = #tpu.dot_dimension_numbers<[1], [0], [0], [1], [0, 0, 1, 1], [], []>} : vector<9x81xf32>, vector<81x128xf32>, vector<9x128xf32> -> vector<9x128xf32>
    %c136 = arith.constant 136 : index
    %c0_8 = arith.constant 0 : index
    %37 = vector.load %arg1[%c136, %c0_8] : memref<504x128xf32, #tpu.memory_space<vmem>>, vector<9x1xf32>
    %38 = vector.broadcast %37 : vector<9x1xf32> to vector<9x128xf32>
    %39 = arith.addf %36, %38 : vector<9x128xf32>
    %cst_9 = arith.constant 0.000000e+00 : f32
    %40 = vector.broadcast %cst_9 : f32 to vector<9x128xf32>
    %41 = arith.maximumf %39, %40 : vector<9x128xf32>
    %c152 = arith.constant 152 : index
    %c0_10 = arith.constant 0 : index
    %42 = vector.load %arg1[%c152, %c0_10] : memref<504x128xf32, #tpu.memory_space<vmem>>, vector<9x64xf32>
    %c168 = arith.constant 168 : index
    %c0_11 = arith.constant 0 : index
    %43 = vector.load %arg1[%c168, %c0_11] : memref<504x128xf32, #tpu.memory_space<vmem>>, vector<9x64xf32>
    %c184 = arith.constant 184 : index
    %c0_12 = arith.constant 0 : index
    %44 = vector.load %arg1[%c184, %c0_12] : memref<504x128xf32, #tpu.memory_space<vmem>>, vector<3x9xf32>
    %c192 = arith.constant 192 : index
    %c0_13 = arith.constant 0 : index
    %45 = vector.load %arg1[%c192, %c0_13] : memref<504x128xf32, #tpu.memory_space<vmem>>, vector<9x3xf32>
    %46 = vector.extract_strided_slice %41 {offsets = [0, 0], sizes = [9, 64], strides = [1, 1]} : vector<9x128xf32> to vector<9x64xf32>
    %47 = vector.extract_strided_slice %41 {offsets = [0, 64], sizes = [9, 64], strides = [1, 1]} : vector<9x128xf32> to vector<9x64xf32>
    %48 = arith.mulf %46, %42 : vector<9x64xf32>
    %cst_14 = arith.constant dense<0.000000e+00> : vector<9xf32>
    %49 = vector.multi_reduction <add>, %48, %cst_14 [1] : vector<9x64xf32> to vector<9xf32>
    %50 = vector.shape_cast %49 : vector<9xf32> to vector<9x1xf32>
    %51 = arith.mulf %47, %42 : vector<9x64xf32>
    %cst_15 = arith.constant dense<0.000000e+00> : vector<9xf32>
    %52 = vector.multi_reduction <add>, %51, %cst_15 [1] : vector<9x64xf32> to vector<9xf32>
    %53 = vector.shape_cast %52 : vector<9xf32> to vector<9x1xf32>
    %54 = arith.mulf %46, %43 : vector<9x64xf32>
    %cst_16 = arith.constant dense<0.000000e+00> : vector<9xf32>
    %55 = vector.multi_reduction <add>, %54, %cst_16 [1] : vector<9x64xf32> to vector<9xf32>
    %56 = vector.shape_cast %55 : vector<9xf32> to vector<9x1xf32>
    %57 = arith.mulf %47, %43 : vector<9x64xf32>
    %cst_17 = arith.constant dense<0.000000e+00> : vector<9xf32>
    %58 = vector.multi_reduction <add>, %57, %cst_17 [1] : vector<9x64xf32> to vector<9xf32>
    %59 = vector.shape_cast %58 : vector<9xf32> to vector<9x1xf32>
    %60 = tpu.concatenate %50, %53, %56, %59 in 1 : vector<9x1xf32>, vector<9x1xf32>, vector<9x1xf32>, vector<9x1xf32> -> vector<9x4xf32>
    %cst_18 = arith.constant dense<0.000000e+00> : vector<3x4xf32>
    %61 = tpu.matmul %44, %60, %cst_18 {dimension_numbers = #tpu.dot_dimension_numbers<[1], [0], [0], [1], [0, 0, 1, 1], [], []>} : vector<3x9xf32>, vector<9x4xf32>, vector<3x4xf32> -> vector<3x4xf32>
    %cst_19 = arith.constant 0.000000e+00 : f32
    %62 = vector.broadcast %cst_19 : f32 to vector<3x4xf32>
    %63 = arith.maximumf %61, %62 : vector<3x4xf32>
    %cst_20 = arith.constant dense<0.000000e+00> : vector<9x4xf32>
    %64 = tpu.matmul %45, %63, %cst_20 {dimension_numbers = #tpu.dot_dimension_numbers<[1], [0], [0], [1], [0, 0, 1, 1], [], []>} : vector<9x3xf32>, vector<3x4xf32>, vector<9x4xf32> -> vector<9x4xf32>
    %65 = vector.extract_strided_slice %64 {offsets = [0, 0], sizes = [9, 2], strides = [1, 1]} : vector<9x4xf32> to vector<9x2xf32>
    %66 = vector.extract_strided_slice %64 {offsets = [0, 2], sizes = [9, 2], strides = [1, 1]} : vector<9x4xf32> to vector<9x2xf32>
    %cst_21 = arith.constant 2.000000e+00 : f32
    %67 = vector.broadcast %cst_21 : f32 to vector<9x2xf32>
    %68 = arith.mulf %67, %66 : vector<9x2xf32>
    %69 = arith.addf %65, %68 : vector<9x2xf32>
    %70 = arith.negf %69 : vector<9x2xf32>
    %71 = math.exp %70 : vector<9x2xf32>
    %cst_22 = arith.constant 1.000000e+00 : f32
    %72 = vector.broadcast %cst_22 : f32 to vector<9x2xf32>
    %73 = arith.addf %72, %71 : vector<9x2xf32>
    %74 = arith.divf %72, %73 : vector<9x2xf32>
    %75 = vector.extract_strided_slice %74 {offsets = [0, 0], sizes = [9, 1], strides = [1, 1]} : vector<9x2xf32> to vector<9x1xf32>
    %76 = vector.broadcast %75 : vector<9x1xf32> to vector<9x64xf32>
    %77 = arith.mulf %46, %76 : vector<9x64xf32>
    %78 = vector.extract_strided_slice %74 {offsets = [0, 1], sizes = [9, 1], strides = [1, 1]} : vector<9x2xf32> to vector<9x1xf32>
    %79 = vector.broadcast %78 : vector<9x1xf32> to vector<9x64xf32>
    %80 = arith.mulf %47, %79 : vector<9x64xf32>
    %81 = tpu.concatenate %77, %80 in 1 : vector<9x64xf32>, vector<9x64xf32> -> vector<9x128xf32>
    %c208 = arith.constant 208 : index
    %c0_23 = arith.constant 0 : index
    %82 = vector.load %arg1[%c208, %c0_23] : memref<504x128xf32, #tpu.memory_space<vmem>>, vector<3x9xf32>
    %cst_24 = arith.constant dense<0.000000e+00> : vector<3x128xf32>
    %83 = tpu.matmul %82, %81, %cst_24 {dimension_numbers = #tpu.dot_dimension_numbers<[1], [0], [0], [1], [0, 0, 1, 1], [], []>} : vector<3x9xf32>, vector<9x128xf32>, vector<3x128xf32> -> vector<3x128xf32>
    %84 = arith.negf %83 : vector<3x128xf32>
    %85 = math.exp %84 : vector<3x128xf32>
    %cst_25 = arith.constant 1.000000e+00 : f32
    %86 = vector.broadcast %cst_25 : f32 to vector<3x128xf32>
    %87 = arith.addf %86, %85 : vector<3x128xf32>
    %88 = arith.divf %86, %87 : vector<3x128xf32>
    %89 = vector.extract_strided_slice %81 {offsets = [0, 0], sizes = [3, 128], strides = [1, 1]} : vector<9x128xf32> to vector<3x128xf32>
    %90 = vector.extract_strided_slice %88 {offsets = [0, 0], sizes = [1, 128], strides = [1, 1]} : vector<3x128xf32> to vector<1x128xf32>
    %91 = vector.broadcast %90 : vector<1x128xf32> to vector<3x128xf32>
    %92 = arith.mulf %89, %91 : vector<3x128xf32>
    %93 = vector.extract_strided_slice %81 {offsets = [3, 0], sizes = [3, 128], strides = [1, 1]} : vector<9x128xf32> to vector<3x128xf32>
    %94 = vector.extract_strided_slice %88 {offsets = [1, 0], sizes = [1, 128], strides = [1, 1]} : vector<3x128xf32> to vector<1x128xf32>
    %95 = vector.broadcast %94 : vector<1x128xf32> to vector<3x128xf32>
    %96 = arith.mulf %93, %95 : vector<3x128xf32>
    %97 = vector.extract_strided_slice %81 {offsets = [6, 0], sizes = [3, 128], strides = [1, 1]} : vector<9x128xf32> to vector<3x128xf32>
    %98 = vector.extract_strided_slice %88 {offsets = [2, 0], sizes = [1, 128], strides = [1, 1]} : vector<3x128xf32> to vector<1x128xf32>
    %99 = vector.broadcast %98 : vector<1x128xf32> to vector<3x128xf32>
    %100 = arith.mulf %97, %99 : vector<3x128xf32>
    %101 = tpu.concatenate %92, %96, %100 in 0 : vector<3x128xf32>, vector<3x128xf32>, vector<3x128xf32> -> vector<9x128xf32>
    %c216 = arith.constant 216 : index
    %c0_26 = arith.constant 0 : index
    %102 = vector.load %arg1[%c216, %c0_26] : memref<504x128xf32, #tpu.memory_space<vmem>>, vector<9x6xf32>
    %103 = vector.extract_strided_slice %1 {offsets = [24, 0], sizes = [6, 128], strides = [1, 1]} : vector<54x128xf32> to vector<6x128xf32>
    %cst_27 = arith.constant dense<0.000000e+00> : vector<9x128xf32>
    %104 = tpu.matmul %102, %103, %cst_27 {dimension_numbers = #tpu.dot_dimension_numbers<[1], [0], [0], [1], [0, 0, 1, 1], [], []>} : vector<9x6xf32>, vector<6x128xf32>, vector<9x128xf32> -> vector<9x128xf32>
    %c232 = arith.constant 232 : index
    %c0_28 = arith.constant 0 : index
    %105 = vector.load %arg1[%c232, %c0_28] : memref<504x128xf32, #tpu.memory_space<vmem>>, vector<9x1xf32>
    %106 = vector.broadcast %105 : vector<9x1xf32> to vector<9x128xf32>
    %107 = arith.addf %104, %106 : vector<9x128xf32>
    %cst_29 = arith.constant 0.000000e+00 : f32
    %108 = vector.broadcast %cst_29 : f32 to vector<9x128xf32>
    %109 = arith.maximumf %107, %108 : vector<9x128xf32>
    %110 = arith.addf %101, %109 : vector<9x128xf32>
    %111 = vector.extract_strided_slice %110 {offsets = [0, 119], sizes = [9, 9], strides = [1, 1]} : vector<9x128xf32> to vector<9x9xf32>
    %112 = vector.extract_strided_slice %110 {offsets = [0, 0], sizes = [9, 119], strides = [1, 1]} : vector<9x128xf32> to vector<9x119xf32>
    %113 = tpu.concatenate %111, %112 in 1 : vector<9x9xf32>, vector<9x119xf32> -> vector<9x128xf32>
    %114 = vector.extract_strided_slice %110 {offsets = [0, 120], sizes = [9, 8], strides = [1, 1]} : vector<9x128xf32> to vector<9x8xf32>
    %115 = vector.extract_strided_slice %110 {offsets = [0, 0], sizes = [9, 120], strides = [1, 1]} : vector<9x128xf32> to vector<9x120xf32>
    %116 = tpu.concatenate %114, %115 in 1 : vector<9x8xf32>, vector<9x120xf32> -> vector<9x128xf32>
    %117 = vector.extract_strided_slice %110 {offsets = [0, 121], sizes = [9, 7], strides = [1, 1]} : vector<9x128xf32> to vector<9x7xf32>
    %118 = vector.extract_strided_slice %110 {offsets = [0, 0], sizes = [9, 121], strides = [1, 1]} : vector<9x128xf32> to vector<9x121xf32>
    %119 = tpu.concatenate %117, %118 in 1 : vector<9x7xf32>, vector<9x121xf32> -> vector<9x128xf32>
    %120 = vector.extract_strided_slice %110 {offsets = [0, 127], sizes = [9, 1], strides = [1, 1]} : vector<9x128xf32> to vector<9x1xf32>
    %121 = vector.extract_strided_slice %110 {offsets = [0, 0], sizes = [9, 127], strides = [1, 1]} : vector<9x128xf32> to vector<9x127xf32>
    %122 = tpu.concatenate %120, %121 in 1 : vector<9x1xf32>, vector<9x127xf32> -> vector<9x128xf32>
    %123 = vector.extract_strided_slice %110 {offsets = [0, 1], sizes = [9, 127], strides = [1, 1]} : vector<9x128xf32> to vector<9x127xf32>
    %124 = vector.extract_strided_slice %110 {offsets = [0, 0], sizes = [9, 1], strides = [1, 1]} : vector<9x128xf32> to vector<9x1xf32>
    %125 = tpu.concatenate %123, %124 in 1 : vector<9x127xf32>, vector<9x1xf32> -> vector<9x128xf32>
    %126 = vector.extract_strided_slice %110 {offsets = [0, 7], sizes = [9, 121], strides = [1, 1]} : vector<9x128xf32> to vector<9x121xf32>
    %127 = vector.extract_strided_slice %110 {offsets = [0, 0], sizes = [9, 7], strides = [1, 1]} : vector<9x128xf32> to vector<9x7xf32>
    %128 = tpu.concatenate %126, %127 in 1 : vector<9x121xf32>, vector<9x7xf32> -> vector<9x128xf32>
    %129 = vector.extract_strided_slice %110 {offsets = [0, 8], sizes = [9, 120], strides = [1, 1]} : vector<9x128xf32> to vector<9x120xf32>
    %130 = vector.extract_strided_slice %110 {offsets = [0, 0], sizes = [9, 8], strides = [1, 1]} : vector<9x128xf32> to vector<9x8xf32>
    %131 = tpu.concatenate %129, %130 in 1 : vector<9x120xf32>, vector<9x8xf32> -> vector<9x128xf32>
    %132 = vector.extract_strided_slice %110 {offsets = [0, 9], sizes = [9, 119], strides = [1, 1]} : vector<9x128xf32> to vector<9x119xf32>
    %133 = vector.extract_strided_slice %110 {offsets = [0, 0], sizes = [9, 9], strides = [1, 1]} : vector<9x128xf32> to vector<9x9xf32>
    %134 = tpu.concatenate %132, %133 in 1 : vector<9x119xf32>, vector<9x9xf32> -> vector<9x128xf32>
    %135 = tpu.concatenate %113, %116, %119, %122, %110, %125, %128, %131, %134 in 0 : vector<9x128xf32>, vector<9x128xf32>, vector<9x128xf32>, vector<9x128xf32>, vector<9x128xf32>, vector<9x128xf32>, vector<9x128xf32>, vector<9x128xf32>, vector<9x128xf32> -> vector<81x128xf32>
    %136 = arith.mulf %135, %0 : vector<81x128xf32>
    %c248 = arith.constant 248 : index
    %c0_30 = arith.constant 0 : index
    %137 = vector.load %arg1[%c248, %c0_30] : memref<504x128xf32, #tpu.memory_space<vmem>>, vector<9x81xf32>
    %cst_31 = arith.constant dense<0.000000e+00> : vector<9x128xf32>
    %138 = tpu.matmul %137, %136, %cst_31 {dimension_numbers = #tpu.dot_dimension_numbers<[1], [0], [0], [1], [0, 0, 1, 1], [], []>} : vector<9x81xf32>, vector<81x128xf32>, vector<9x128xf32> -> vector<9x128xf32>
    %c264 = arith.constant 264 : index
    %c0_32 = arith.constant 0 : index
    %139 = vector.load %arg1[%c264, %c0_32] : memref<504x128xf32, #tpu.memory_space<vmem>>, vector<9x1xf32>
    %140 = vector.broadcast %139 : vector<9x1xf32> to vector<9x128xf32>
    %141 = arith.addf %138, %140 : vector<9x128xf32>
    %cst_33 = arith.constant 0.000000e+00 : f32
    %142 = vector.broadcast %cst_33 : f32 to vector<9x128xf32>
    %143 = arith.maximumf %141, %142 : vector<9x128xf32>
    %144 = vector.extract_strided_slice %143 {offsets = [0, 119], sizes = [9, 9], strides = [1, 1]} : vector<9x128xf32> to vector<9x9xf32>
    %145 = vector.extract_strided_slice %143 {offsets = [0, 0], sizes = [9, 119], strides = [1, 1]} : vector<9x128xf32> to vector<9x119xf32>
    %146 = tpu.concatenate %144, %145 in 1 : vector<9x9xf32>, vector<9x119xf32> -> vector<9x128xf32>
    %147 = vector.extract_strided_slice %143 {offsets = [0, 120], sizes = [9, 8], strides = [1, 1]} : vector<9x128xf32> to vector<9x8xf32>
    %148 = vector.extract_strided_slice %143 {offsets = [0, 0], sizes = [9, 120], strides = [1, 1]} : vector<9x128xf32> to vector<9x120xf32>
    %149 = tpu.concatenate %147, %148 in 1 : vector<9x8xf32>, vector<9x120xf32> -> vector<9x128xf32>
    %150 = vector.extract_strided_slice %143 {offsets = [0, 121], sizes = [9, 7], strides = [1, 1]} : vector<9x128xf32> to vector<9x7xf32>
    %151 = vector.extract_strided_slice %143 {offsets = [0, 0], sizes = [9, 121], strides = [1, 1]} : vector<9x128xf32> to vector<9x121xf32>
    %152 = tpu.concatenate %150, %151 in 1 : vector<9x7xf32>, vector<9x121xf32> -> vector<9x128xf32>
    %153 = vector.extract_strided_slice %143 {offsets = [0, 127], sizes = [9, 1], strides = [1, 1]} : vector<9x128xf32> to vector<9x1xf32>
    %154 = vector.extract_strided_slice %143 {offsets = [0, 0], sizes = [9, 127], strides = [1, 1]} : vector<9x128xf32> to vector<9x127xf32>
    %155 = tpu.concatenate %153, %154 in 1 : vector<9x1xf32>, vector<9x127xf32> -> vector<9x128xf32>
    %156 = vector.extract_strided_slice %143 {offsets = [0, 1], sizes = [9, 127], strides = [1, 1]} : vector<9x128xf32> to vector<9x127xf32>
    %157 = vector.extract_strided_slice %143 {offsets = [0, 0], sizes = [9, 1], strides = [1, 1]} : vector<9x128xf32> to vector<9x1xf32>
    %158 = tpu.concatenate %156, %157 in 1 : vector<9x127xf32>, vector<9x1xf32> -> vector<9x128xf32>
    %159 = vector.extract_strided_slice %143 {offsets = [0, 7], sizes = [9, 121], strides = [1, 1]} : vector<9x128xf32> to vector<9x121xf32>
    %160 = vector.extract_strided_slice %143 {offsets = [0, 0], sizes = [9, 7], strides = [1, 1]} : vector<9x128xf32> to vector<9x7xf32>
    %161 = tpu.concatenate %159, %160 in 1 : vector<9x121xf32>, vector<9x7xf32> -> vector<9x128xf32>
    %162 = vector.extract_strided_slice %143 {offsets = [0, 8], sizes = [9, 120], strides = [1, 1]} : vector<9x128xf32> to vector<9x120xf32>
    %163 = vector.extract_strided_slice %143 {offsets = [0, 0], sizes = [9, 8], strides = [1, 1]} : vector<9x128xf32> to vector<9x8xf32>
    %164 = tpu.concatenate %162, %163 in 1 : vector<9x120xf32>, vector<9x8xf32> -> vector<9x128xf32>
    %165 = vector.extract_strided_slice %143 {offsets = [0, 9], sizes = [9, 119], strides = [1, 1]} : vector<9x128xf32> to vector<9x119xf32>
    %166 = vector.extract_strided_slice %143 {offsets = [0, 0], sizes = [9, 9], strides = [1, 1]} : vector<9x128xf32> to vector<9x9xf32>
    %167 = tpu.concatenate %165, %166 in 1 : vector<9x119xf32>, vector<9x9xf32> -> vector<9x128xf32>
    %168 = tpu.concatenate %146, %149, %152, %155, %143, %158, %161, %164, %167 in 0 : vector<9x128xf32>, vector<9x128xf32>, vector<9x128xf32>, vector<9x128xf32>, vector<9x128xf32>, vector<9x128xf32>, vector<9x128xf32>, vector<9x128xf32>, vector<9x128xf32> -> vector<81x128xf32>
    %169 = arith.mulf %168, %0 : vector<81x128xf32>
    %c280 = arith.constant 280 : index
    %c0_34 = arith.constant 0 : index
    %170 = vector.load %arg1[%c280, %c0_34] : memref<504x128xf32, #tpu.memory_space<vmem>>, vector<9x81xf32>
    %cst_35 = arith.constant dense<0.000000e+00> : vector<9x128xf32>
    %171 = tpu.matmul %170, %169, %cst_35 {dimension_numbers = #tpu.dot_dimension_numbers<[1], [0], [0], [1], [0, 0, 1, 1], [], []>} : vector<9x81xf32>, vector<81x128xf32>, vector<9x128xf32> -> vector<9x128xf32>
    %c296 = arith.constant 296 : index
    %c0_36 = arith.constant 0 : index
    %172 = vector.load %arg1[%c296, %c0_36] : memref<504x128xf32, #tpu.memory_space<vmem>>, vector<9x1xf32>
    %173 = vector.broadcast %172 : vector<9x1xf32> to vector<9x128xf32>
    %174 = arith.addf %171, %173 : vector<9x128xf32>
    %cst_37 = arith.constant 0.000000e+00 : f32
    %175 = vector.broadcast %cst_37 : f32 to vector<9x128xf32>
    %176 = arith.maximumf %174, %175 : vector<9x128xf32>
    %c312 = arith.constant 312 : index
    %c0_38 = arith.constant 0 : index
    %177 = vector.load %arg1[%c312, %c0_38] : memref<504x128xf32, #tpu.memory_space<vmem>>, vector<9x64xf32>
    %c328 = arith.constant 328 : index
    %c0_39 = arith.constant 0 : index
    %178 = vector.load %arg1[%c328, %c0_39] : memref<504x128xf32, #tpu.memory_space<vmem>>, vector<9x64xf32>
    %c344 = arith.constant 344 : index
    %c0_40 = arith.constant 0 : index
    %179 = vector.load %arg1[%c344, %c0_40] : memref<504x128xf32, #tpu.memory_space<vmem>>, vector<3x9xf32>
    %c352 = arith.constant 352 : index
    %c0_41 = arith.constant 0 : index
    %180 = vector.load %arg1[%c352, %c0_41] : memref<504x128xf32, #tpu.memory_space<vmem>>, vector<9x3xf32>
    %181 = vector.extract_strided_slice %176 {offsets = [0, 0], sizes = [9, 64], strides = [1, 1]} : vector<9x128xf32> to vector<9x64xf32>
    %182 = vector.extract_strided_slice %176 {offsets = [0, 64], sizes = [9, 64], strides = [1, 1]} : vector<9x128xf32> to vector<9x64xf32>
    %183 = arith.mulf %181, %177 : vector<9x64xf32>
    %cst_42 = arith.constant dense<0.000000e+00> : vector<9xf32>
    %184 = vector.multi_reduction <add>, %183, %cst_42 [1] : vector<9x64xf32> to vector<9xf32>
    %185 = vector.shape_cast %184 : vector<9xf32> to vector<9x1xf32>
    %186 = arith.mulf %182, %177 : vector<9x64xf32>
    %cst_43 = arith.constant dense<0.000000e+00> : vector<9xf32>
    %187 = vector.multi_reduction <add>, %186, %cst_43 [1] : vector<9x64xf32> to vector<9xf32>
    %188 = vector.shape_cast %187 : vector<9xf32> to vector<9x1xf32>
    %189 = arith.mulf %181, %178 : vector<9x64xf32>
    %cst_44 = arith.constant dense<0.000000e+00> : vector<9xf32>
    %190 = vector.multi_reduction <add>, %189, %cst_44 [1] : vector<9x64xf32> to vector<9xf32>
    %191 = vector.shape_cast %190 : vector<9xf32> to vector<9x1xf32>
    %192 = arith.mulf %182, %178 : vector<9x64xf32>
    %cst_45 = arith.constant dense<0.000000e+00> : vector<9xf32>
    %193 = vector.multi_reduction <add>, %192, %cst_45 [1] : vector<9x64xf32> to vector<9xf32>
    %194 = vector.shape_cast %193 : vector<9xf32> to vector<9x1xf32>
    %195 = tpu.concatenate %185, %188, %191, %194 in 1 : vector<9x1xf32>, vector<9x1xf32>, vector<9x1xf32>, vector<9x1xf32> -> vector<9x4xf32>
    %cst_46 = arith.constant dense<0.000000e+00> : vector<3x4xf32>
    %196 = tpu.matmul %179, %195, %cst_46 {dimension_numbers = #tpu.dot_dimension_numbers<[1], [0], [0], [1], [0, 0, 1, 1], [], []>} : vector<3x9xf32>, vector<9x4xf32>, vector<3x4xf32> -> vector<3x4xf32>
    %cst_47 = arith.constant 0.000000e+00 : f32
    %197 = vector.broadcast %cst_47 : f32 to vector<3x4xf32>
    %198 = arith.maximumf %196, %197 : vector<3x4xf32>
    %cst_48 = arith.constant dense<0.000000e+00> : vector<9x4xf32>
    %199 = tpu.matmul %180, %198, %cst_48 {dimension_numbers = #tpu.dot_dimension_numbers<[1], [0], [0], [1], [0, 0, 1, 1], [], []>} : vector<9x3xf32>, vector<3x4xf32>, vector<9x4xf32> -> vector<9x4xf32>
    %200 = vector.extract_strided_slice %199 {offsets = [0, 0], sizes = [9, 2], strides = [1, 1]} : vector<9x4xf32> to vector<9x2xf32>
    %201 = vector.extract_strided_slice %199 {offsets = [0, 2], sizes = [9, 2], strides = [1, 1]} : vector<9x4xf32> to vector<9x2xf32>
    %cst_49 = arith.constant 2.000000e+00 : f32
    %202 = vector.broadcast %cst_49 : f32 to vector<9x2xf32>
    %203 = arith.mulf %202, %201 : vector<9x2xf32>
    %204 = arith.addf %200, %203 : vector<9x2xf32>
    %205 = arith.negf %204 : vector<9x2xf32>
    %206 = math.exp %205 : vector<9x2xf32>
    %cst_50 = arith.constant 1.000000e+00 : f32
    %207 = vector.broadcast %cst_50 : f32 to vector<9x2xf32>
    %208 = arith.addf %207, %206 : vector<9x2xf32>
    %209 = arith.divf %207, %208 : vector<9x2xf32>
    %210 = vector.extract_strided_slice %209 {offsets = [0, 0], sizes = [9, 1], strides = [1, 1]} : vector<9x2xf32> to vector<9x1xf32>
    %211 = vector.broadcast %210 : vector<9x1xf32> to vector<9x64xf32>
    %212 = arith.mulf %181, %211 : vector<9x64xf32>
    %213 = vector.extract_strided_slice %209 {offsets = [0, 1], sizes = [9, 1], strides = [1, 1]} : vector<9x2xf32> to vector<9x1xf32>
    %214 = vector.broadcast %213 : vector<9x1xf32> to vector<9x64xf32>
    %215 = arith.mulf %182, %214 : vector<9x64xf32>
    %216 = tpu.concatenate %212, %215 in 1 : vector<9x64xf32>, vector<9x64xf32> -> vector<9x128xf32>
    %c368 = arith.constant 368 : index
    %c0_51 = arith.constant 0 : index
    %217 = vector.load %arg1[%c368, %c0_51] : memref<504x128xf32, #tpu.memory_space<vmem>>, vector<3x9xf32>
    %cst_52 = arith.constant dense<0.000000e+00> : vector<3x128xf32>
    %218 = tpu.matmul %217, %216, %cst_52 {dimension_numbers = #tpu.dot_dimension_numbers<[1], [0], [0], [1], [0, 0, 1, 1], [], []>} : vector<3x9xf32>, vector<9x128xf32>, vector<3x128xf32> -> vector<3x128xf32>
    %219 = arith.negf %218 : vector<3x128xf32>
    %220 = math.exp %219 : vector<3x128xf32>
    %cst_53 = arith.constant 1.000000e+00 : f32
    %221 = vector.broadcast %cst_53 : f32 to vector<3x128xf32>
    %222 = arith.addf %221, %220 : vector<3x128xf32>
    %223 = arith.divf %221, %222 : vector<3x128xf32>
    %224 = vector.extract_strided_slice %216 {offsets = [0, 0], sizes = [3, 128], strides = [1, 1]} : vector<9x128xf32> to vector<3x128xf32>
    %225 = vector.extract_strided_slice %223 {offsets = [0, 0], sizes = [1, 128], strides = [1, 1]} : vector<3x128xf32> to vector<1x128xf32>
    %226 = vector.broadcast %225 : vector<1x128xf32> to vector<3x128xf32>
    %227 = arith.mulf %224, %226 : vector<3x128xf32>
    %228 = vector.extract_strided_slice %216 {offsets = [3, 0], sizes = [3, 128], strides = [1, 1]} : vector<9x128xf32> to vector<3x128xf32>
    %229 = vector.extract_strided_slice %223 {offsets = [1, 0], sizes = [1, 128], strides = [1, 1]} : vector<3x128xf32> to vector<1x128xf32>
    %230 = vector.broadcast %229 : vector<1x128xf32> to vector<3x128xf32>
    %231 = arith.mulf %228, %230 : vector<3x128xf32>
    %232 = vector.extract_strided_slice %216 {offsets = [6, 0], sizes = [3, 128], strides = [1, 1]} : vector<9x128xf32> to vector<3x128xf32>
    %233 = vector.extract_strided_slice %223 {offsets = [2, 0], sizes = [1, 128], strides = [1, 1]} : vector<3x128xf32> to vector<1x128xf32>
    %234 = vector.broadcast %233 : vector<1x128xf32> to vector<3x128xf32>
    %235 = arith.mulf %232, %234 : vector<3x128xf32>
    %236 = tpu.concatenate %227, %231, %235 in 0 : vector<3x128xf32>, vector<3x128xf32>, vector<3x128xf32> -> vector<9x128xf32>
    %237 = arith.addf %236, %110 : vector<9x128xf32>
    %238 = vector.extract_strided_slice %237 {offsets = [0, 119], sizes = [9, 9], strides = [1, 1]} : vector<9x128xf32> to vector<9x9xf32>
    %239 = vector.extract_strided_slice %237 {offsets = [0, 0], sizes = [9, 119], strides = [1, 1]} : vector<9x128xf32> to vector<9x119xf32>
    %240 = tpu.concatenate %238, %239 in 1 : vector<9x9xf32>, vector<9x119xf32> -> vector<9x128xf32>
    %241 = vector.extract_strided_slice %237 {offsets = [0, 120], sizes = [9, 8], strides = [1, 1]} : vector<9x128xf32> to vector<9x8xf32>
    %242 = vector.extract_strided_slice %237 {offsets = [0, 0], sizes = [9, 120], strides = [1, 1]} : vector<9x128xf32> to vector<9x120xf32>
    %243 = tpu.concatenate %241, %242 in 1 : vector<9x8xf32>, vector<9x120xf32> -> vector<9x128xf32>
    %244 = vector.extract_strided_slice %237 {offsets = [0, 121], sizes = [9, 7], strides = [1, 1]} : vector<9x128xf32> to vector<9x7xf32>
    %245 = vector.extract_strided_slice %237 {offsets = [0, 0], sizes = [9, 121], strides = [1, 1]} : vector<9x128xf32> to vector<9x121xf32>
    %246 = tpu.concatenate %244, %245 in 1 : vector<9x7xf32>, vector<9x121xf32> -> vector<9x128xf32>
    %247 = vector.extract_strided_slice %237 {offsets = [0, 127], sizes = [9, 1], strides = [1, 1]} : vector<9x128xf32> to vector<9x1xf32>
    %248 = vector.extract_strided_slice %237 {offsets = [0, 0], sizes = [9, 127], strides = [1, 1]} : vector<9x128xf32> to vector<9x127xf32>
    %249 = tpu.concatenate %247, %248 in 1 : vector<9x1xf32>, vector<9x127xf32> -> vector<9x128xf32>
    %250 = vector.extract_strided_slice %237 {offsets = [0, 1], sizes = [9, 127], strides = [1, 1]} : vector<9x128xf32> to vector<9x127xf32>
    %251 = vector.extract_strided_slice %237 {offsets = [0, 0], sizes = [9, 1], strides = [1, 1]} : vector<9x128xf32> to vector<9x1xf32>
    %252 = tpu.concatenate %250, %251 in 1 : vector<9x127xf32>, vector<9x1xf32> -> vector<9x128xf32>
    %253 = vector.extract_strided_slice %237 {offsets = [0, 7], sizes = [9, 121], strides = [1, 1]} : vector<9x128xf32> to vector<9x121xf32>
    %254 = vector.extract_strided_slice %237 {offsets = [0, 0], sizes = [9, 7], strides = [1, 1]} : vector<9x128xf32> to vector<9x7xf32>
    %255 = tpu.concatenate %253, %254 in 1 : vector<9x121xf32>, vector<9x7xf32> -> vector<9x128xf32>
    %256 = vector.extract_strided_slice %237 {offsets = [0, 8], sizes = [9, 120], strides = [1, 1]} : vector<9x128xf32> to vector<9x120xf32>
    %257 = vector.extract_strided_slice %237 {offsets = [0, 0], sizes = [9, 8], strides = [1, 1]} : vector<9x128xf32> to vector<9x8xf32>
    %258 = tpu.concatenate %256, %257 in 1 : vector<9x120xf32>, vector<9x8xf32> -> vector<9x128xf32>
    %259 = vector.extract_strided_slice %237 {offsets = [0, 9], sizes = [9, 119], strides = [1, 1]} : vector<9x128xf32> to vector<9x119xf32>
    %260 = vector.extract_strided_slice %237 {offsets = [0, 0], sizes = [9, 9], strides = [1, 1]} : vector<9x128xf32> to vector<9x9xf32>
    %261 = tpu.concatenate %259, %260 in 1 : vector<9x119xf32>, vector<9x9xf32> -> vector<9x128xf32>
    %262 = tpu.concatenate %240, %243, %246, %249, %237, %252, %255, %258, %261 in 0 : vector<9x128xf32>, vector<9x128xf32>, vector<9x128xf32>, vector<9x128xf32>, vector<9x128xf32>, vector<9x128xf32>, vector<9x128xf32>, vector<9x128xf32>, vector<9x128xf32> -> vector<81x128xf32>
    %263 = arith.mulf %262, %0 : vector<81x128xf32>
    %c376 = arith.constant 376 : index
    %c0_54 = arith.constant 0 : index
    %264 = vector.load %arg1[%c376, %c0_54] : memref<504x128xf32, #tpu.memory_space<vmem>>, vector<9x81xf32>
    %cst_55 = arith.constant dense<0.000000e+00> : vector<9x128xf32>
    %265 = tpu.matmul %264, %263, %cst_55 {dimension_numbers = #tpu.dot_dimension_numbers<[1], [0], [0], [1], [0, 0, 1, 1], [], []>} : vector<9x81xf32>, vector<81x128xf32>, vector<9x128xf32> -> vector<9x128xf32>
    %c392 = arith.constant 392 : index
    %c0_56 = arith.constant 0 : index
    %266 = vector.load %arg1[%c392, %c0_56] : memref<504x128xf32, #tpu.memory_space<vmem>>, vector<9x1xf32>
    %267 = vector.broadcast %266 : vector<9x1xf32> to vector<9x128xf32>
    %268 = arith.addf %265, %267 : vector<9x128xf32>
    %cst_57 = arith.constant 0.000000e+00 : f32
    %269 = vector.broadcast %cst_57 : f32 to vector<9x128xf32>
    %270 = arith.maximumf %268, %269 : vector<9x128xf32>
    %271 = vector.extract_strided_slice %270 {offsets = [0, 119], sizes = [9, 9], strides = [1, 1]} : vector<9x128xf32> to vector<9x9xf32>
    %272 = vector.extract_strided_slice %270 {offsets = [0, 0], sizes = [9, 119], strides = [1, 1]} : vector<9x128xf32> to vector<9x119xf32>
    %273 = tpu.concatenate %271, %272 in 1 : vector<9x9xf32>, vector<9x119xf32> -> vector<9x128xf32>
    %274 = vector.extract_strided_slice %270 {offsets = [0, 120], sizes = [9, 8], strides = [1, 1]} : vector<9x128xf32> to vector<9x8xf32>
    %275 = vector.extract_strided_slice %270 {offsets = [0, 0], sizes = [9, 120], strides = [1, 1]} : vector<9x128xf32> to vector<9x120xf32>
    %276 = tpu.concatenate %274, %275 in 1 : vector<9x8xf32>, vector<9x120xf32> -> vector<9x128xf32>
    %277 = vector.extract_strided_slice %270 {offsets = [0, 121], sizes = [9, 7], strides = [1, 1]} : vector<9x128xf32> to vector<9x7xf32>
    %278 = vector.extract_strided_slice %270 {offsets = [0, 0], sizes = [9, 121], strides = [1, 1]} : vector<9x128xf32> to vector<9x121xf32>
    %279 = tpu.concatenate %277, %278 in 1 : vector<9x7xf32>, vector<9x121xf32> -> vector<9x128xf32>
    %280 = vector.extract_strided_slice %270 {offsets = [0, 127], sizes = [9, 1], strides = [1, 1]} : vector<9x128xf32> to vector<9x1xf32>
    %281 = vector.extract_strided_slice %270 {offsets = [0, 0], sizes = [9, 127], strides = [1, 1]} : vector<9x128xf32> to vector<9x127xf32>
    %282 = tpu.concatenate %280, %281 in 1 : vector<9x1xf32>, vector<9x127xf32> -> vector<9x128xf32>
    %283 = vector.extract_strided_slice %270 {offsets = [0, 1], sizes = [9, 127], strides = [1, 1]} : vector<9x128xf32> to vector<9x127xf32>
    %284 = vector.extract_strided_slice %270 {offsets = [0, 0], sizes = [9, 1], strides = [1, 1]} : vector<9x128xf32> to vector<9x1xf32>
    %285 = tpu.concatenate %283, %284 in 1 : vector<9x127xf32>, vector<9x1xf32> -> vector<9x128xf32>
    %286 = vector.extract_strided_slice %270 {offsets = [0, 7], sizes = [9, 121], strides = [1, 1]} : vector<9x128xf32> to vector<9x121xf32>
    %287 = vector.extract_strided_slice %270 {offsets = [0, 0], sizes = [9, 7], strides = [1, 1]} : vector<9x128xf32> to vector<9x7xf32>
    %288 = tpu.concatenate %286, %287 in 1 : vector<9x121xf32>, vector<9x7xf32> -> vector<9x128xf32>
    %289 = vector.extract_strided_slice %270 {offsets = [0, 8], sizes = [9, 120], strides = [1, 1]} : vector<9x128xf32> to vector<9x120xf32>
    %290 = vector.extract_strided_slice %270 {offsets = [0, 0], sizes = [9, 8], strides = [1, 1]} : vector<9x128xf32> to vector<9x8xf32>
    %291 = tpu.concatenate %289, %290 in 1 : vector<9x120xf32>, vector<9x8xf32> -> vector<9x128xf32>
    %292 = vector.extract_strided_slice %270 {offsets = [0, 9], sizes = [9, 119], strides = [1, 1]} : vector<9x128xf32> to vector<9x119xf32>
    %293 = vector.extract_strided_slice %270 {offsets = [0, 0], sizes = [9, 9], strides = [1, 1]} : vector<9x128xf32> to vector<9x9xf32>
    %294 = tpu.concatenate %292, %293 in 1 : vector<9x119xf32>, vector<9x9xf32> -> vector<9x128xf32>
    %295 = tpu.concatenate %273, %276, %279, %282, %270, %285, %288, %291, %294 in 0 : vector<9x128xf32>, vector<9x128xf32>, vector<9x128xf32>, vector<9x128xf32>, vector<9x128xf32>, vector<9x128xf32>, vector<9x128xf32>, vector<9x128xf32>, vector<9x128xf32> -> vector<81x128xf32>
    %296 = arith.mulf %295, %0 : vector<81x128xf32>
    %c408 = arith.constant 408 : index
    %c0_58 = arith.constant 0 : index
    %297 = vector.load %arg1[%c408, %c0_58] : memref<504x128xf32, #tpu.memory_space<vmem>>, vector<9x81xf32>
    %cst_59 = arith.constant dense<0.000000e+00> : vector<9x128xf32>
    %298 = tpu.matmul %297, %296, %cst_59 {dimension_numbers = #tpu.dot_dimension_numbers<[1], [0], [0], [1], [0, 0, 1, 1], [], []>} : vector<9x81xf32>, vector<81x128xf32>, vector<9x128xf32> -> vector<9x128xf32>
    %c424 = arith.constant 424 : index
    %c0_60 = arith.constant 0 : index
    %299 = vector.load %arg1[%c424, %c0_60] : memref<504x128xf32, #tpu.memory_space<vmem>>, vector<9x1xf32>
    %300 = vector.broadcast %299 : vector<9x1xf32> to vector<9x128xf32>
    %301 = arith.addf %298, %300 : vector<9x128xf32>
    %cst_61 = arith.constant 0.000000e+00 : f32
    %302 = vector.broadcast %cst_61 : f32 to vector<9x128xf32>
    %303 = arith.maximumf %301, %302 : vector<9x128xf32>
    %c440 = arith.constant 440 : index
    %c0_62 = arith.constant 0 : index
    %304 = vector.load %arg1[%c440, %c0_62] : memref<504x128xf32, #tpu.memory_space<vmem>>, vector<9x64xf32>
    %c456 = arith.constant 456 : index
    %c0_63 = arith.constant 0 : index
    %305 = vector.load %arg1[%c456, %c0_63] : memref<504x128xf32, #tpu.memory_space<vmem>>, vector<9x64xf32>
    %c472 = arith.constant 472 : index
    %c0_64 = arith.constant 0 : index
    %306 = vector.load %arg1[%c472, %c0_64] : memref<504x128xf32, #tpu.memory_space<vmem>>, vector<3x9xf32>
    %c480 = arith.constant 480 : index
    %c0_65 = arith.constant 0 : index
    %307 = vector.load %arg1[%c480, %c0_65] : memref<504x128xf32, #tpu.memory_space<vmem>>, vector<9x3xf32>
    %308 = vector.extract_strided_slice %303 {offsets = [0, 0], sizes = [9, 64], strides = [1, 1]} : vector<9x128xf32> to vector<9x64xf32>
    %309 = vector.extract_strided_slice %303 {offsets = [0, 64], sizes = [9, 64], strides = [1, 1]} : vector<9x128xf32> to vector<9x64xf32>
    %310 = arith.mulf %308, %304 : vector<9x64xf32>
    %cst_66 = arith.constant dense<0.000000e+00> : vector<9xf32>
    %311 = vector.multi_reduction <add>, %310, %cst_66 [1] : vector<9x64xf32> to vector<9xf32>
    %312 = vector.shape_cast %311 : vector<9xf32> to vector<9x1xf32>
    %313 = arith.mulf %309, %304 : vector<9x64xf32>
    %cst_67 = arith.constant dense<0.000000e+00> : vector<9xf32>
    %314 = vector.multi_reduction <add>, %313, %cst_67 [1] : vector<9x64xf32> to vector<9xf32>
    %315 = vector.shape_cast %314 : vector<9xf32> to vector<9x1xf32>
    %316 = arith.mulf %308, %305 : vector<9x64xf32>
    %cst_68 = arith.constant dense<0.000000e+00> : vector<9xf32>
    %317 = vector.multi_reduction <add>, %316, %cst_68 [1] : vector<9x64xf32> to vector<9xf32>
    %318 = vector.shape_cast %317 : vector<9xf32> to vector<9x1xf32>
    %319 = arith.mulf %309, %305 : vector<9x64xf32>
    %cst_69 = arith.constant dense<0.000000e+00> : vector<9xf32>
    %320 = vector.multi_reduction <add>, %319, %cst_69 [1] : vector<9x64xf32> to vector<9xf32>
    %321 = vector.shape_cast %320 : vector<9xf32> to vector<9x1xf32>
    %322 = tpu.concatenate %312, %315, %318, %321 in 1 : vector<9x1xf32>, vector<9x1xf32>, vector<9x1xf32>, vector<9x1xf32> -> vector<9x4xf32>
    %cst_70 = arith.constant dense<0.000000e+00> : vector<3x4xf32>
    %323 = tpu.matmul %306, %322, %cst_70 {dimension_numbers = #tpu.dot_dimension_numbers<[1], [0], [0], [1], [0, 0, 1, 1], [], []>} : vector<3x9xf32>, vector<9x4xf32>, vector<3x4xf32> -> vector<3x4xf32>
    %cst_71 = arith.constant 0.000000e+00 : f32
    %324 = vector.broadcast %cst_71 : f32 to vector<3x4xf32>
    %325 = arith.maximumf %323, %324 : vector<3x4xf32>
    %cst_72 = arith.constant dense<0.000000e+00> : vector<9x4xf32>
    %326 = tpu.matmul %307, %325, %cst_72 {dimension_numbers = #tpu.dot_dimension_numbers<[1], [0], [0], [1], [0, 0, 1, 1], [], []>} : vector<9x3xf32>, vector<3x4xf32>, vector<9x4xf32> -> vector<9x4xf32>
    %327 = vector.extract_strided_slice %326 {offsets = [0, 0], sizes = [9, 2], strides = [1, 1]} : vector<9x4xf32> to vector<9x2xf32>
    %328 = vector.extract_strided_slice %326 {offsets = [0, 2], sizes = [9, 2], strides = [1, 1]} : vector<9x4xf32> to vector<9x2xf32>
    %cst_73 = arith.constant 2.000000e+00 : f32
    %329 = vector.broadcast %cst_73 : f32 to vector<9x2xf32>
    %330 = arith.mulf %329, %328 : vector<9x2xf32>
    %331 = arith.addf %327, %330 : vector<9x2xf32>
    %332 = arith.negf %331 : vector<9x2xf32>
    %333 = math.exp %332 : vector<9x2xf32>
    %cst_74 = arith.constant 1.000000e+00 : f32
    %334 = vector.broadcast %cst_74 : f32 to vector<9x2xf32>
    %335 = arith.addf %334, %333 : vector<9x2xf32>
    %336 = arith.divf %334, %335 : vector<9x2xf32>
    %337 = vector.extract_strided_slice %336 {offsets = [0, 0], sizes = [9, 1], strides = [1, 1]} : vector<9x2xf32> to vector<9x1xf32>
    %338 = vector.broadcast %337 : vector<9x1xf32> to vector<9x64xf32>
    %339 = arith.mulf %308, %338 : vector<9x64xf32>
    %340 = vector.extract_strided_slice %336 {offsets = [0, 1], sizes = [9, 1], strides = [1, 1]} : vector<9x2xf32> to vector<9x1xf32>
    %341 = vector.broadcast %340 : vector<9x1xf32> to vector<9x64xf32>
    %342 = arith.mulf %309, %341 : vector<9x64xf32>
    %343 = tpu.concatenate %339, %342 in 1 : vector<9x64xf32>, vector<9x64xf32> -> vector<9x128xf32>
    %c496 = arith.constant 496 : index
    %c0_75 = arith.constant 0 : index
    %344 = vector.load %arg1[%c496, %c0_75] : memref<504x128xf32, #tpu.memory_space<vmem>>, vector<1x9xf32>
    %cst_76 = arith.constant dense<0.000000e+00> : vector<1x128xf32>
    %345 = tpu.matmul %344, %343, %cst_76 {dimension_numbers = #tpu.dot_dimension_numbers<[1], [0], [0], [1], [0, 0, 1, 1], [], []>} : vector<1x9xf32>, vector<9x128xf32>, vector<1x128xf32> -> vector<1x128xf32>
    %346 = arith.negf %345 : vector<1x128xf32>
    %347 = math.exp %346 : vector<1x128xf32>
    %cst_77 = arith.constant 1.000000e+00 : f32
    %348 = vector.broadcast %cst_77 : f32 to vector<1x128xf32>
    %349 = arith.addf %348, %347 : vector<1x128xf32>
    %350 = arith.divf %348, %349 : vector<1x128xf32>
    %351 = vector.broadcast %350 : vector<1x128xf32> to vector<9x128xf32>
    %352 = arith.mulf %343, %351 : vector<9x128xf32>
    %353 = arith.addf %352, %237 : vector<9x128xf32>
    %c0_78 = arith.constant 0 : index
    %c0_79 = arith.constant 0 : index
    %354 = vector.load %arg2[%c0_78, %c0_79] : memref<9x128xf32, #tpu.memory_space<vmem>>, vector<9x128xf32>
    tpu.vector_store %arg2[%c0_78, %c0_79], %353 {strides = array<i32>} : memref<9x128xf32, #tpu.memory_space<vmem>>, vector<9x128xf32>,
    return
  }
}

</mosaic_0001>

<llo_original>
// kernel: forward.1
$region0: #{forward.1}
  #allocation0 [shape = 'u32[]', space=smem, size = 0x4, offset = 0x4, fixed_abs, tag = 'smem constant byte address 0x4 - core index']
  #allocation1 [shape = 'u32[144,128]{1,0:T(1,128)}', space=vmem, size = 0x12000, scoped, tag = 'internal scratch']
  %s0 = inlined_call_operand.vmem [shape: f32[54,128], index: 0, kind: input, shape index: {}]
  %s1 = inlined_call_operand.vmem [shape: f32[504,128], index: 1, kind: input, shape index: {}]
  %s2 = inlined_call_operand.vmem [shape: f32[9,128], index: 2, kind: output, shape index: {}]
  %s3 = sld [smem:[#allocation0]]
  $region18: #{forward.1} parent=0
    _
  %s5 = ssub.s32 1, %s3
  %s6 = scalar_select 0, %s5, %s3
  // Predicated region
  $region2: #{forward.1} parent=0 // pred_check
    _
  $region3: #{forward.1} parent=0 // pred_check_branch
    %8 = sbr.rel (0) target = $region5
  $region4: #{forward.1} parent=0 // pred_region
    _
  $region5: #{forward.1} parent=0 // pred_fallthru
    _
  // Predicated region
  $region6: #{forward.1} parent=0 // pred_check
    _
  $region7: #{forward.1} parent=0 // pred_check_branch
    %10 = sbr.rel (0) target = $region9
  $region8: #{forward.1} parent=0 // pred_region
    _
  $region9: #{forward.1} parent=0 // pred_fallthru
    _
  %v11 = vld [vmem:[%s1] sm:$0xff]
  %v12 = vld [vmem:[%s1 + $0x8] sm:$0xff]
  %v13 = vld [vmem:[%s1 + $0x10] sm:$0xff]
  %v14 = vld [vmem:[%s1 + $0x18] sm:$0xff]
  %v15 = vld [vmem:[%s1 + $0x20] sm:$0xff]
  %v16 = vld [vmem:[%s1 + $0x28] sm:$0xff]
  %v17 = vld [vmem:[%s1 + $0x30] sm:$0xff]
  %v18 = vld [vmem:[%s1 + $0x38] sm:$0xff]
  %v19 = vld [vmem:[%s1 + $0x40] sm:$0xff]
  %v20 = vld [vmem:[%s1 + $0x48] sm:$0xff]
  %v21 = vld [vmem:[%s1 + $0x50] sm:$0x1]
  %v22 = vld [vmem:[%s0] sm:$0xff]
  %v23 = vld [vmem:[%s0 + $0x8] sm:$0xff]
  %v24 = vld [vmem:[%s0 + $0x10] sm:$0xff]
  %v25 = vld [vmem:[%s0 + $0x18] sm:$0xff]
  %v26 = vld [vmem:[%s0 + $0x20] sm:$0xff]
  %v27 = vld [vmem:[%s0 + $0x28] sm:$0xff]
  %v28 = vld [vmem:[%s0 + $0x30] sm:$0x3f]
  %v29 = vld [vmem:[%s1 + $0x58] sm:$0xff]
  %v30 = vld [vmem:[%s1 + $0x60] sm:$0x1]
  %v31 = vld [vmem:[%s1 + $0x68] sm:$0xff]
  %v32 = vld [vmem:[%s1 + $0x70] sm:$0x1]
  %34 = vset.pattern.permute.xlu0 0
  %35 = vperm.xlu0 %34, %v31
  %v36 = vpop.permute.xlu0 %35
  %39 = vset.pattern.permute.xlu0 0
  %40 = vperm.xlu0 %39, %v32
  %v41 = vpop.permute.xlu0 %40
  %vm43 = vcmask 441344
  %v45 = vsel %vm43, %v29, 0
  %v48 = vsel %vm43, %v30, 0
  %vm50 = vcmask 1045504
  %v52 = vsel %vm50, %v28, 0
  %54 = vmatprep.subr.mxu0 0.0
  %55 = vmatpush1.msra.mxu0 %v22
  %56 = vmatprep.subr.mxu0 0.0
  %57 = vmatpush1.msra.mxu0 %v23
  %58 = vmatprep.subr.mxu0 0.0
  %59 = vmatpush1.msra.mxu0 %v24
  %60 = vmatprep.subr.mxu0 0.0
  %61 = vmatpush1.msra.mxu0 %v25
  %62 = vmatprep.subr.mxu0 0.0
  %63 = vmatpush1.msra.mxu0 %v26
  %64 = vmatprep.subr.mxu0 0.0
  %65 = vmatpush1.msra.mxu0 %v27
  %66 = vmatprep.subr.mxu0 0.0
  %67 = vmatpush1.msra.mxu0 %v52
  %68 = vmatprep.subr.mxu0 0.0
  %69 = vmatpush1.msra.mxu0 0.0
  %70 = vmatprep.subr.mxu0 0.0
  %71 = vmatpush1.msra.mxu0 0.0
  %72 = vmatprep.subr.mxu0 0.0
  %73 = vmatpush1.msra.mxu0 0.0
  %74 = vmatprep.subr.mxu0 0.0
  %75 = vmatpush1.msra.mxu0 0.0
  %76 = vmatprep.subr.mxu0 0.0
  %77 = vmatpush1.msra.mxu0 0.0
  %78 = vmatprep.subr.mxu0 0.0
  %79 = vmatpush1.msra.mxu0 0.0
  %80 = vmatprep.subr.mxu0 0.0
  %81 = vmatpush1.msra.mxu0 0.0
  %82 = vmatprep.subr.mxu0 0.0
  %83 = vmatpush1.msra.mxu0 0.0
  %84 = vmatprep.subr.mxu0 0.0
  %85 = vmatpush1.msra.mxu0 0.0
  %86 = vmatprep.subr.mxu0 0.0
  %87 = vmatpush1.msra.mxu0 0.0
  %88 = vmatprep.subr.mxu0 0.0
  %89 = vmatpush1.msra.mxu0 0.0
  %90 = vmatprep.subr.mxu0 0.0
  %91 = vmatpush1.msra.mxu0 0.0
  %92 = vmatprep.subr.mxu0 0.0
  %93 = vmatpush1.msra.mxu0 0.0
  %94 = vmatprep.subr.mxu0 0.0
  %95 = vmatpush1.msra.mxu0 0.0
  %96 = vmatprep.subr.mxu0 0.0
  %97 = vmatpush1.msra.mxu0 0.0
  %98 = vmatprep.subr.mxu0 0.0
  %99 = vmatpush1.msra.mxu0 0.0
  %100 = vmatprep.subr.mxu0 0.0
  %101 = vmatpush1.msra.mxu0 0.0
  %102 = vmatprep.subr.mxu0 0.0
  %103 = vmatpush1.msra.mxu0 0.0
  %104 = vmatprep.subr.mxu0 0.0
  %105 = vmatpush1.msra.mxu0 0.0
  %106 = vmatprep.subr.mxu0 0.0
  %107 = vmatpush1.msra.mxu0 0.0
  %108 = vmatprep.subr.mxu0 0.0
  %109 = vmatpush1.msra.mxu0 0.0
  %110 = vmatprep.subr.mxu0 0.0
  %111 = vmatpush1.msra.mxu0 0.0
  %112 = vmatprep.subr.mxu0 0.0
  %113 = vmatpush1.msra.mxu0 0.0
  %114 = vmatprep.subr.mxu0 0.0
  %115 = vmatpush1.msra.mxu0 0.0
  %116 = vmatprep.subr.mxu0 0.0
  %117 = vmatpush1.msra.mxu0 0.0
  %118 = vmatprep.mubr.f32.mxu0 0.0
  %119 = vmatmul.mubr.f32.gmra.mrb[0].mxu0 %v45
  %v120 = vpop.f32.mrb[0].mxu0
  %v121 = vadd.f32 %v36, %v120
  %v122 = vpop.f32.mrb[0].mxu0
  %123 = vmatprep.mubr.f32.mxu0 0.0
  %124 = vmatmul.mubr.f32.gmra.mrb[0].mxu0 %v48
  %v125 = vpop.f32.mrb[0].mxu0
  %v126 = vadd.f32 %v41, %v125
  %v127 = vpop.f32.mrb[0].mxu0
  %128 = vdwg.mxu0
  %v129 = vmax.f32 %v121, 0.0
  %v130 = vmax.f32 %v126, 0.0
  %133 = vrot.lane.b32.xlu0 %v129, 9
  %v134 = vpop.permute.xlu0 %133
  %135 = vrot.lane.b32.xlu0 %v130, 9
  %v136 = vpop.permute.xlu0 %135
  %vm139 = vcmask 72704
  %140 = vrot.lane.b32.xlu0 %v129, 8
  %v141 = vpop.permute.xlu0 %140
  %142 = vrot.lane.b32.xlu0 %v130, 8
  %v143 = vpop.permute.xlu0 %142
  %146 = vrot.lane.b32.xlu0 %v129, 7
  %v147 = vpop.permute.xlu0 %146
  %148 = vrot.lane.b32.xlu0 %v130, 7
  %v149 = vpop.permute.xlu0 %148
  %152 = vrot.lane.b32.xlu0 %v129, 1
  %v153 = vpop.permute.xlu0 %152
  %154 = vrot.lane.b32.xlu0 %v130, 1
  %v155 = vpop.permute.xlu0 %154
  %vm158 = vcmask 7168
  %159 = vrot.lane.b32.xlu0 %v129, 127
  %v160 = vpop.permute.xlu0 %159
  %161 = vrot.lane.b32.xlu0 %v130, 127
  %v162 = vpop.permute.xlu0 %161
  %165 = vrot.lane.b32.xlu0 %v129, 121
  %v166 = vpop.permute.xlu0 %165
  %167 = vrot.lane.b32.xlu0 %v130, 121
  %v168 = vpop.permute.xlu0 %167
  %171 = vrot.lane.b32.xlu0 %v129, 120
  %v172 = vpop.permute.xlu0 %171
  %173 = vrot.lane.b32.xlu0 %v130, 120
  %v174 = vpop.permute.xlu0 %173
  %177 = vrot.lane.b32.xlu0 %v129, 119
  %v178 = vpop.permute.xlu0 %177
  %179 = vrot.lane.b32.xlu0 %v130, 119
  %v180 = vpop.permute.xlu0 %179
  %vm185 = vcmask 1040384
  %v186 = vrot.slane %v141, 7
  %v187 = vrot.slane %v143, 7
  %v188 = vsel %vm185, %v186, %v187
  %vm193 = vcmask 1041408
  %v194 = vrot.slane %v147, 6
  %v195 = vrot.slane %v149, 6
  %v196 = vsel %vm193, %v194, %v195
  %vm201 = vcmask 1042432
  %v202 = vrot.slane %v153, 5
  %v203 = vrot.slane %v155, 5
  %v204 = vsel %vm201, %v202, %v203
  %vm207 = vcmask 1043456
  %v208 = vrot.slane %v129, 4
  %v209 = vrot.slane %v130, 4
  %v210 = vsel %vm207, %v208, %v209
  %vm215 = vcmask 1044480
  %v216 = vrot.slane %v160, 3
  %v217 = vrot.slane %v162, 3
  %v218 = vsel %vm215, %v216, %v217
  %v223 = vrot.slane %v166, 2
  %v224 = vrot.slane %v168, 2
  %v225 = vsel %vm50, %v223, %v224
  %vm230 = vcmask 1046528
  %v231 = vrot.slane %v172, 1
  %v232 = vrot.slane %v174, 1
  %v233 = vsel %vm230, %v231, %v232
  %v236 = vsel %vm185, %v136, %v186
  %v237 = vsel %vm193, %v188, %v194
  %v238 = vsel %vm201, %v196, %v202
  %v239 = vsel %vm207, %v204, %v208
  %v240 = vsel %vm215, %v210, %v216
  %v241 = vsel %vm50, %v218, %v223
  %v242 = vsel %vm230, %v225, %v231
  %v243 = vmul.f32 %v134, %v11
  %v244 = vmul.f32 %v236, %v12
  %v245 = vmul.f32 %v237, %v13
  %v246 = vmul.f32 %v238, %v14
  %v247 = vmul.f32 %v239, %v15
  %v248 = vmul.f32 %v240, %v16
  %v249 = vmul.f32 %v241, %v17
  %v250 = vmul.f32 %v242, %v18
  %v251 = vmul.f32 %v233, %v19
  %v252 = vmul.f32 %v178, %v20
  %v253 = vmul.f32 %v180, %v21
  %v254 = vld [vmem:[%s1 + $0x78] sm:$0xff]
  %v255 = vld [vmem:[%s1 + $0x80] sm:$0x1]
  %v256 = vld [vmem:[%s1 + $0x88] sm:$0xff]
  %v257 = vld [vmem:[%s1 + $0x90] sm:$0x1]
  %259 = vset.pattern.permute.xlu0 0
  %260 = vperm.xlu0 %259, %v256
  %v261 = vpop.permute.xlu0 %260
  %264 = vset.pattern.permute.xlu0 0
  %265 = vperm.xlu0 %264, %v257
  %v266 = vpop.permute.xlu0 %265
  %vm268 = vcmask 662528
  %v270 = vsel %vm268, %v254, 0
  %v273 = vsel %vm268, %v255, 0
  %v276 = vsel %vm185, %v253, 0
  %278 = vmatprep.subr.mxu0 0.0
  %279 = vmatpush1.msra.mxu0 %v243
  %280 = vmatprep.subr.mxu0 0.0
  %281 = vmatpush1.msra.mxu0 %v244
  %282 = vmatprep.subr.mxu0 0.0
  %283 = vmatpush1.msra.mxu0 %v245
  %284 = vmatprep.subr.mxu0 0.0
  %285 = vmatpush1.msra.mxu0 %v246
  %286 = vmatprep.subr.mxu0 0.0
  %287 = vmatpush1.msra.mxu0 %v247
  %288 = vmatprep.subr.mxu0 0.0
  %289 = vmatpush1.msra.mxu0 %v248
  %290 = vmatprep.subr.mxu0 0.0
  %291 = vmatpush1.msra.mxu0 %v249
  %292 = vmatprep.subr.mxu0 0.0
  %293 = vmatpush1.msra.mxu0 %v250
  %294 = vmatprep.subr.mxu0 0.0
  %295 = vmatpush1.msra.mxu0 %v251
  %296 = vmatprep.subr.mxu0 0.0
  %297 = vmatpush1.msra.mxu0 %v252
  %298 = vmatprep.subr.mxu0 0.0
  %299 = vmatpush1.msra.mxu0 %v276
  %300 = vmatprep.subr.mxu0 0.0
  %301 = vmatpush1.msra.mxu0 0.0
  %302 = vmatprep.subr.mxu0 0.0
  %303 = vmatpush1.msra.mxu0 0.0
  %304 = vmatprep.subr.mxu0 0.0
  %305 = vmatpush1.msra.mxu0 0.0
  %306 = vmatprep.subr.mxu0 0.0
  %307 = vmatpush1.msra.mxu0 0.0
  %308 = vmatprep.subr.mxu0 0.0
  %309 = vmatpush1.msra.mxu0 0.0
  %310 = vmatprep.subr.mxu0 0.0
  %311 = vmatpush1.msra.mxu0 0.0
  %312 = vmatprep.subr.mxu0 0.0
  %313 = vmatpush1.msra.mxu0 0.0
  %314 = vmatprep.subr.mxu0 0.0
  %315 = vmatpush1.msra.mxu0 0.0
  %316 = vmatprep.subr.mxu0 0.0
  %317 = vmatpush1.msra.mxu0 0.0
  %318 = vmatprep.subr.mxu0 0.0
  %319 = vmatpush1.msra.mxu0 0.0
  %320 = vmatprep.subr.mxu0 0.0
  %321 = vmatpush1.msra.mxu0 0.0
  %322 = vmatprep.subr.mxu0 0.0
  %323 = vmatpush1.msra.mxu0 0.0
  %324 = vmatprep.subr.mxu0 0.0
  %325 = vmatpush1.msra.mxu0 0.0
  %326 = vmatprep.subr.mxu0 0.0
  %327 = vmatpush1.msra.mxu0 0.0
  %328 = vmatprep.subr.mxu0 0.0
  %329 = vmatpush1.msra.mxu0 0.0
  %330 = vmatprep.subr.mxu0 0.0
  %331 = vmatpush1.msra.mxu0 0.0
  %332 = vmatprep.subr.mxu0 0.0
  %333 = vmatpush1.msra.mxu0 0.0
  %334 = vmatprep.subr.mxu0 0.0
  %335 = vmatpush1.msra.mxu0 0.0
  %336 = vmatprep.subr.mxu0 0.0
  %337 = vmatpush1.msra.mxu0 0.0
  %338 = vmatprep.subr.mxu0 0.0
  %339 = vmatpush1.msra.mxu0 0.0
  %340 = vmatprep.subr.mxu0 0.0
  %341 = vmatpush1.msra.mxu0 0.0
  %342 = vmatprep.mubr.f32.mxu0 0.0
  %343 = vmatmul.mubr.f32.gmra.mrb[0].mxu0 %v270
  %v344 = vpop.f32.mrb[0].mxu0
  %v345 = vadd.f32 %v261, %v344
  %v346 = vpop.f32.mrb[0].mxu0
  %347 = vmatprep.mubr.f32.mxu0 0.0
  %348 = vmatmul.mubr.f32.gmra.mrb[0].mxu0 %v273
  %v349 = vpop.f32.mrb[0].mxu0
  %v350 = vadd.f32 %v266, %v349
  %v351 = vpop.f32.mrb[0].mxu0
  %352 = vdwg.mxu0
  %v353 = vmax.f32 %v345, 0.0
  %v354 = vmax.f32 %v350, 0.0
  %v355 = vld [vmem:[%s1 + $0x98] sm:$0xff]
  %v356 = vld [vmem:[%s1 + $0xa0] sm:$0x1]
  %v357 = vld [vmem:[%s1 + $0xa8] sm:$0xff]
  %v358 = vld [vmem:[%s1 + $0xb0] sm:$0x1]
  %v359 = vld [vmem:[%s1 + $0xb8] sm:$0x7]
  %v360 = vld [vmem:[%s1 + $0xc0] sm:$0xff]
  %v361 = vld [vmem:[%s1 + $0xc8] sm:$0x1]
  %v362 = vmul.f32 %v353, %v355
  %v363 = vmul.f32 %v354, %v356
  %vm364 = vcmask 523264
  %v365 = vsel %vm364, %v362, 0.0
  %366 = vadd.xlane.f32.xlu0 %v365
  %v367 = vpop.xlane.xlu0 %366
  %vm368 = vcmask 516096
  %v369 = vsel %vm368, %v363, 0.0
  %370 = vadd.xlane.f32.xlu0 %v369
  %v371 = vpop.xlane.xlu0 %370
  %374 = vrot.lane.b32.xlu0 %v355, 64
  %v375 = vpop.permute.xlu0 %374
  %376 = vrot.lane.b32.xlu0 %v356, 64
  %v377 = vpop.permute.xlu0 %376
  %v380 = vmul.f32 %v353, %v375
  %v381 = vmul.f32 %v354, %v377
  %384 = vrot.lane.b32.xlu0 %v380, 64
  %v385 = vpop.permute.xlu0 %384
  %386 = vrot.lane.b32.xlu0 %v381, 64
  %v387 = vpop.permute.xlu0 %386
  %v390 = vsel %vm364, %v385, 0.0
  %391 = vadd.xlane.f32.xlu0 %v390
  %v392 = vpop.xlane.xlu0 %391
  %v393 = vsel %vm368, %v387, 0.0
  %394 = vadd.xlane.f32.xlu0 %v393
  %v395 = vpop.xlane.xlu0 %394
  %v396 = vmul.f32 %v353, %v357
  %v397 = vmul.f32 %v354, %v358
  %v398 = vsel %vm364, %v396, 0.0
  %399 = vadd.xlane.f32.xlu0 %v398
  %v400 = vpop.xlane.xlu0 %399
  %v401 = vsel %vm368, %v397, 0.0
  %402 = vadd.xlane.f32.xlu0 %v401
  %v403 = vpop.xlane.xlu0 %402
  %406 = vrot.lane.b32.xlu0 %v357, 64
  %v407 = vpop.permute.xlu0 %406
  %408 = vrot.lane.b32.xlu0 %v358, 64
  %v409 = vpop.permute.xlu0 %408
  %v412 = vmul.f32 %v353, %v407
  %v413 = vmul.f32 %v354, %v409
  %416 = vrot.lane.b32.xlu0 %v412, 64
  %v417 = vpop.permute.xlu0 %416
  %418 = vrot.lane.b32.xlu0 %v413, 64
  %v419 = vpop.permute.xlu0 %418
  %v422 = vsel %vm364, %v417, 0.0
  %423 = vadd.xlane.f32.xlu0 %v422
  %v424 = vpop.xlane.xlu0 %423
  %v425 = vsel %vm368, %v419, 0.0
  %426 = vadd.xlane.f32.xlu0 %v425
  %v427 = vpop.xlane.xlu0 %426
  %v428 = vsel %vm158, %v367, %v392
  %v429 = vsel %vm158, %v371, %v395
  %vm430 = vcmask 15360
  %v431 = vsel %vm430, %v428, %v400
  %v432 = vsel %vm430, %v429, %v403
  %vm433 = vcmask 23552
  %v434 = vsel %vm433, %v431, %v424
  %v435 = vsel %vm433, %v432, %v427
  %v437 = vsel %vm139, %v359, 0
  %v440 = vsel %vm185, %v435, 0
  %442 = vmatprep.subr.mxu0 0.0
  %443 = vmatpush1.msra.mxu0 %v434
  %444 = vmatprep.subr.mxu0 0.0
  %445 = vmatpush1.msra.mxu0 %v440
  %446 = vmatprep.subr.mxu0 0.0
  %447 = vmatpush1.msra.mxu0 0.0
  %448 = vmatprep.subr.mxu0 0.0
  %449 = vmatpush1.msra.mxu0 0.0
  %450 = vmatprep.subr.mxu0 0.0
  %451 = vmatpush1.msra.mxu0 0.0
  %452 = vmatprep.subr.mxu0 0.0
  %453 = vmatpush1.msra.mxu0 0.0
  %454 = vmatprep.subr.mxu0 0.0
  %455 = vmatpush1.msra.mxu0 0.0
  %456 = vmatprep.subr.mxu0 0.0
  %457 = vmatpush1.msra.mxu0 0.0
  %458 = vmatprep.subr.mxu0 0.0
  %459 = vmatpush1.msra.mxu0 0.0
  %460 = vmatprep.subr.mxu0 0.0
  %461 = vmatpush1.msra.mxu0 0.0
  %462 = vmatprep.subr.mxu0 0.0
  %463 = vmatpush1.msra.mxu0 0.0
  %464 = vmatprep.subr.mxu0 0.0
  %465 = vmatpush1.msra.mxu0 0.0
  %466 = vmatprep.subr.mxu0 0.0
  %467 = vmatpush1.msra.mxu0 0.0
  %468 = vmatprep.subr.mxu0 0.0
  %469 = vmatpush1.msra.mxu0 0.0
  %470 = vmatprep.subr.mxu0 0.0
  %471 = vmatpush1.msra.mxu0 0.0
  %472 = vmatprep.subr.mxu0 0.0
  %473 = vmatpush1.msra.mxu0 0.0
  %474 = vmatprep.subr.mxu0 0.0
  %475 = vmatpush1.msra.mxu0 0.0
  %476 = vmatprep.subr.mxu0 0.0
  %477 = vmatpush1.msra.mxu0 0.0
  %478 = vmatprep.subr.mxu0 0.0
  %479 = vmatpush1.msra.mxu0 0.0
  %480 = vmatprep.subr.mxu0 0.0
  %481 = vmatpush1.msra.mxu0 0.0
  %482 = vmatprep.subr.mxu0 0.0
  %483 = vmatpush1.msra.mxu0 0.0
  %484 = vmatprep.subr.mxu0 0.0
  %485 = vmatpush1.msra.mxu0 0.0
  %486 = vmatprep.subr.mxu0 0.0
  %487 = vmatpush1.msra.mxu0 0.0
  %488 = vmatprep.subr.mxu0 0.0
  %489 = vmatpush1.msra.mxu0 0.0
  %490 = vmatprep.subr.mxu0 0.0
  %491 = vmatpush1.msra.mxu0 0.0
  %492 = vmatprep.subr.mxu0 0.0
  %493 = vmatpush1.msra.mxu0 0.0
  %494 = vmatprep.subr.mxu0 0.0
  %495 = vmatpush1.msra.mxu0 0.0
  %496 = vmatprep.subr.mxu0 0.0
  %497 = vmatpush1.msra.mxu0 0.0
  %498 = vmatprep.subr.mxu0 0.0
  %499 = vmatpush1.msra.mxu0 0.0
  %500 = vmatprep.subr.mxu0 0.0
  %501 = vmatpush1.msra.mxu0 0.0
  %502 = vmatprep.subr.mxu0 0.0
  %503 = vmatpush1.msra.mxu0 0.0
  %504 = vmatprep.subr.mxu0 0.0
  %505 = vmatpush1.msra.mxu0 0.0
  %506 = vmatprep.mubr.f32.mxu0 0.0
  %507 = vmatmul.mubr.f32.gmra.mrb[0].mxu0 %v437
  %v508 = vpop.f32.mrb[0].mxu0
  %v509 = vadd.f32 0.0, %v508
  %v510 = vpop.f32.mrb[0].mxu0
  %511 = vdwg.mxu0
  %v512 = vmax.f32 %v509, 0.0
  %v514 = vsel %vm433, %v360, 0
  %v517 = vsel %vm433, %v361, 0
  %v520 = vsel %vm201, %v512, 0
  %522 = vmatprep.subr.mxu0 0.0
  %523 = vmatpush1.msra.mxu0 %v520
  %524 = vmatprep.subr.mxu0 0.0
  %525 = vmatpush1.msra.mxu0 0.0
  %526 = vmatprep.subr.mxu0 0.0
  %527 = vmatpush1.msra.mxu0 0.0
  %528 = vmatprep.subr.mxu0 0.0
  %529 = vmatpush1.msra.mxu0 0.0
  %530 = vmatprep.subr.mxu0 0.0
  %531 = vmatpush1.msra.mxu0 0.0
  %532 = vmatprep.subr.mxu0 0.0
  %533 = vmatpush1.msra.mxu0 0.0
  %534 = vmatprep.subr.mxu0 0.0
  %535 = vmatpush1.msra.mxu0 0.0
  %536 = vmatprep.subr.mxu0 0.0
  %537 = vmatpush1.msra.mxu0 0.0
  %538 = vmatprep.subr.mxu0 0.0
  %539 = vmatpush1.msra.mxu0 0.0
  %540 = vmatprep.subr.mxu0 0.0
  %541 = vmatpush1.msra.mxu0 0.0
  %542 = vmatprep.subr.mxu0 0.0
  %543 = vmatpush1.msra.mxu0 0.0
  %544 = vmatprep.subr.mxu0 0.0
  %545 = vmatpush1.msra.mxu0 0.0
  %546 = vmatprep.subr.mxu0 0.0
  %547 = vmatpush1.msra.mxu0 0.0
  %548 = vmatprep.subr.mxu0 0.0
  %549 = vmatpush1.msra.mxu0 0.0
  %550 = vmatprep.subr.mxu0 0.0
  %551 = vmatpush1.msra.mxu0 0.0
  %552 = vmatprep.subr.mxu0 0.0
  %553 = vmatpush1.msra.mxu0 0.0
  %554 = vmatprep.subr.mxu0 0.0
  %555 = vmatpush1.msra.mxu0 0.0
  %556 = vmatprep.subr.mxu0 0.0
  %557 = vmatpush1.msra.mxu0 0.0
  %558 = vmatprep.subr.mxu0 0.0
  %559 = vmatpush1.msra.mxu0 0.0
  %560 = vmatprep.subr.mxu0 0.0
  %561 = vmatpush1.msra.mxu0 0.0
  %562 = vmatprep.subr.mxu0 0.0
  %563 = vmatpush1.msra.mxu0 0.0
  %564 = vmatprep.subr.mxu0 0.0
  %565 = vmatpush1.msra.mxu0 0.0
  %566 = vmatprep.subr.mxu0 0.0
  %567 = vmatpush1.msra.mxu0 0.0
  %568 = vmatprep.subr.mxu0 0.0
  %569 = vmatpush1.msra.mxu0 0.0
  %570 = vmatprep.subr.mxu0 0.0
  %571 = vmatpush1.msra.mxu0 0.0
  %572 = vmatprep.subr.mxu0 0.0
  %573 = vmatpush1.msra.mxu0 0.0
  %574 = vmatprep.subr.mxu0 0.0
  %575 = vmatpush1.msra.mxu0 0.0
  %576 = vmatprep.subr.mxu0 0.0
  %577 = vmatpush1.msra.mxu0 0.0
  %578 = vmatprep.subr.mxu0 0.0
  %579 = vmatpush1.msra.mxu0 0.0
  %580 = vmatprep.subr.mxu0 0.0
  %581 = vmatpush1.msra.mxu0 0.0
  %582 = vmatprep.subr.mxu0 0.0
  %583 = vmatpush1.msra.mxu0 0.0
  %584 = vmatprep.subr.mxu0 0.0
  %585 = vmatpush1.msra.mxu0 0.0
  %586 = vmatprep.mubr.f32.mxu0 0.0
  %587 = vmatmul.mubr.f32.gmra.mrb[0].mxu0 %v514
  %v588 = vpop.f32.mrb[0].mxu0
  %v589 = vadd.f32 0.0, %v588
  %v590 = vpop.f32.mrb[0].mxu0
  %591 = vmatprep.mubr.f32.mxu0 0.0
  %592 = vmatmul.mubr.f32.gmra.mrb[0].mxu0 %v517
  %v593 = vpop.f32.mrb[0].mxu0
  %v594 = vadd.f32 0.0, %v593
  %v595 = vpop.f32.mrb[0].mxu0
  %596 = vdwg.mxu0
  %v597 = vmul.f32 %v589, 2.0
  %v598 = vmul.f32 %v594, 2.0
  %601 = vrot.lane.b32.xlu0 %v597, 126
  %v602 = vpop.permute.xlu0 %601
  %603 = vrot.lane.b32.xlu0 %v598, 126
  %v604 = vpop.permute.xlu0 %603
  %v607 = vadd.f32 %v589, %v602
  %v608 = vadd.f32 %v594, %v604
  %v609 = vxor.u32 %v607, 2147483648
  %v610 = vxor.u32 %v608, 2147483648
  %v611 = vmul.f32 %v609, 1.442695
  %v612 = vpow.pop %v611
  %v613 = vmul.f32 %v610, 1.442695
  %v614 = vpow.pop %v613
  %v615 = vadd.f32 %v612, 1.0
  %v616 = vadd.f32 %v614, 1.0
  %v617 = vrcp.pop %v615
  %v618 = vmul.f32 1.0, %v617
  %v619 = vrcp.pop %v616
  %v620 = vmul.f32 1.0, %v619
  %622 = vset.pattern.permute.xlu0 0
  %623 = vperm.xlu0 %622, %v618
  %v624 = vpop.permute.xlu0 %623
  %627 = vset.pattern.permute.xlu0 0
  %628 = vperm.xlu0 %627, %v620
  %v629 = vpop.permute.xlu0 %628
  %v631 = vmul.f32 %v353, %v624
  %v632 = vmul.f32 %v354, %v629
  %633 = vset.pattern.permute.xlu0 1
  %634 = vperm.xlu0 %633, %v618
  %v635 = vpop.permute.xlu0 %634
  %637 = vset.pattern.permute.xlu0 1
  %638 = vperm.xlu0 %637, %v620
  %v639 = vpop.permute.xlu0 %638
  %v641 = vmul.f32 %v353, %v635
  %v642 = vmul.f32 %v354, %v639
  %v643 = vsel %vm364, %v631, %v641
  %v644 = vsel %vm364, %v632, %v642
  %v645 = vld [vmem:[%s1 + $0xd0] sm:$0x7]
  %v647 = vsel %vm139, %v645, 0
  %v650 = vsel %vm185, %v644, 0
  %652 = vmatprep.subr.mxu0 0.0
  %653 = vmatpush1.msra.mxu0 %v643
  %654 = vmatprep.subr.mxu0 0.0
  %655 = vmatpush1.msra.mxu0 %v650
  %656 = vmatprep.subr.mxu0 0.0
  %657 = vmatpush1.msra.mxu0 0.0
  %658 = vmatprep.subr.mxu0 0.0
  %659 = vmatpush1.msra.mxu0 0.0
  %660 = vmatprep.subr.mxu0 0.0
  %661 = vmatpush1.msra.mxu0 0.0
  %662 = vmatprep.subr.mxu0 0.0
  %663 = vmatpush1.msra.mxu0 0.0
  %664 = vmatprep.subr.mxu0 0.0
  %665 = vmatpush1.msra.mxu0 0.0
  %666 = vmatprep.subr.mxu0 0.0
  %667 = vmatpush1.msra.mxu0 0.0
  %668 = vmatprep.subr.mxu0 0.0
  %669 = vmatpush1.msra.mxu0 0.0
  %670 = vmatprep.subr.mxu0 0.0
  %671 = vmatpush1.msra.mxu0 0.0
  %672 = vmatprep.subr.mxu0 0.0
  %673 = vmatpush1.msra.mxu0 0.0
  %674 = vmatprep.subr.mxu0 0.0
  %675 = vmatpush1.msra.mxu0 0.0
  %676 = vmatprep.subr.mxu0 0.0
  %677 = vmatpush1.msra.mxu0 0.0
  %678 = vmatprep.subr.mxu0 0.0
  %679 = vmatpush1.msra.mxu0 0.0
  %680 = vmatprep.subr.mxu0 0.0
  %681 = vmatpush1.msra.mxu0 0.0
  %682 = vmatprep.subr.mxu0 0.0
  %683 = vmatpush1.msra.mxu0 0.0
  %684 = vmatprep.subr.mxu0 0.0
  %685 = vmatpush1.msra.mxu0 0.0
  %686 = vmatprep.subr.mxu0 0.0
  %687 = vmatpush1.msra.mxu0 0.0
  %688 = vmatprep.subr.mxu0 0.0
  %689 = vmatpush1.msra.mxu0 0.0
  %690 = vmatprep.subr.mxu0 0.0
  %691 = vmatpush1.msra.mxu0 0.0
  %692 = vmatprep.subr.mxu0 0.0
  %693 = vmatpush1.msra.mxu0 0.0
  %694 = vmatprep.subr.mxu0 0.0
  %695 = vmatpush1.msra.mxu0 0.0
  %696 = vmatprep.subr.mxu0 0.0
  %697 = vmatpush1.msra.mxu0 0.0
  %698 = vmatprep.subr.mxu0 0.0
  %699 = vmatpush1.msra.mxu0 0.0
  %700 = vmatprep.subr.mxu0 0.0
  %701 = vmatpush1.msra.mxu0 0.0
  %702 = vmatprep.subr.mxu0 0.0
  %703 = vmatpush1.msra.mxu0 0.0
  %704 = vmatprep.subr.mxu0 0.0
  %705 = vmatpush1.msra.mxu0 0.0
  %706 = vmatprep.subr.mxu0 0.0
  %707 = vmatpush1.msra.mxu0 0.0
  %708 = vmatprep.subr.mxu0 0.0
  %709 = vmatpush1.msra.mxu0 0.0
  %710 = vmatprep.subr.mxu0 0.0
  %711 = vmatpush1.msra.mxu0 0.0
  %712 = vmatprep.subr.mxu0 0.0
  %713 = vmatpush1.msra.mxu0 0.0
  %714 = vmatprep.subr.mxu0 0.0
  %715 = vmatpush1.msra.mxu0 0.0
  %716 = vmatprep.mubr.f32.mxu0 0.0
  %717 = vmatmul.mubr.f32.gmra.mrb[0].mxu0 %v647
  %v718 = vpop.f32.mrb[0].mxu0
  %v719 = vadd.f32 0.0, %v718
  %v720 = vpop.f32.mrb[0].mxu0
  %721 = vdwg.mxu0
  %v722 = vxor.u32 %v719, 2147483648
  %v723 = vmul.f32 %v722, 1.442695
  %v724 = vpow.pop %v723
  %v725 = vadd.f32 %v724, 1.0
  %v726 = vrcp.pop %v725
  %v727 = vmul.f32 1.0, %v726
  %v728 = vlaneseq
  %v729 = vshrl.u32 %v728, 7
  %v730 = vsub.s32 0, %v729
  %v731 = vrot.slane %v727, %v730
  %v732 = vmul.f32 %v643, %v731
  %v733 = vlaneseq
  %v734 = vshrl.u32 %v733, 7
  %v735 = vsub.s32 1, %v734
  %v736 = vrot.slane %v727, %v735
  %v737 = vmul.f32 %v643, %v736
  %v738 = vlaneseq
  %v739 = vshrl.u32 %v738, 7
  %v740 = vsub.s32 2, %v739
  %v741 = vrot.slane %v727, %v740
  %v742 = vmul.f32 %v643, %v741
  %v743 = vmul.f32 %v644, %v741
  %v744 = vsel %vm201, %v732, %v737
  %v745 = vsel %vm50, %v744, %v742
  %v746 = vld [vmem:[%s1 + $0xd8] sm:$0xff]
  %v747 = vld [vmem:[%s1 + $0xe0] sm:$0x1]
  %v748 = vld [vmem:[%s1 + $0xe8] sm:$0xff]
  %v749 = vld [vmem:[%s1 + $0xf0] sm:$0x1]
  %751 = vset.pattern.permute.xlu0 0
  %752 = vperm.xlu0 %751, %v748
  %v753 = vpop.permute.xlu0 %752
  %756 = vset.pattern.permute.xlu0 0
  %757 = vperm.xlu0 %756, %v749
  %v758 = vpop.permute.xlu0 %757
  %vm760 = vcmask 48128
  %v762 = vsel %vm760, %v746, 0
  %v765 = vsel %vm760, %v747, 0
  %v768 = vsel %vm50, %v25, 0
  %770 = vmatprep.subr.mxu0 0.0
  %771 = vmatpush1.msra.mxu0 %v768
  %772 = vmatprep.subr.mxu0 0.0
  %773 = vmatpush1.msra.mxu0 0.0
  %774 = vmatprep.subr.mxu0 0.0
  %775 = vmatpush1.msra.mxu0 0.0
  %776 = vmatprep.subr.mxu0 0.0
  %777 = vmatpush1.msra.mxu0 0.0
  %778 = vmatprep.subr.mxu0 0.0
  %779 = vmatpush1.msra.mxu0 0.0
  %780 = vmatprep.subr.mxu0 0.0
  %781 = vmatpush1.msra.mxu0 0.0
  %782 = vmatprep.subr.mxu0 0.0
  %783 = vmatpush1.msra.mxu0 0.0
  %784 = vmatprep.subr.mxu0 0.0
  %785 = vmatpush1.msra.mxu0 0.0
  %786 = vmatprep.subr.mxu0 0.0
  %787 = vmatpush1.msra.mxu0 0.0
  %788 = vmatprep.subr.mxu0 0.0
  %789 = vmatpush1.msra.mxu0 0.0
  %790 = vmatprep.subr.mxu0 0.0
  %791 = vmatpush1.msra.mxu0 0.0
  %792 = vmatprep.subr.mxu0 0.0
  %793 = vmatpush1.msra.mxu0 0.0
  %794 = vmatprep.subr.mxu0 0.0
  %795 = vmatpush1.msra.mxu0 0.0
  %796 = vmatprep.subr.mxu0 0.0
  %797 = vmatpush1.msra.mxu0 0.0
  %798 = vmatprep.subr.mxu0 0.0
  %799 = vmatpush1.msra.mxu0 0.0
  %800 = vmatprep.subr.mxu0 0.0
  %801 = vmatpush1.msra.mxu0 0.0
  %802 = vmatprep.subr.mxu0 0.0
  %803 = vmatpush1.msra.mxu0 0.0
  %804 = vmatprep.subr.mxu0 0.0
  %805 = vmatpush1.msra.mxu0 0.0
  %806 = vmatprep.subr.mxu0 0.0
  %807 = vmatpush1.msra.mxu0 0.0
  %808 = vmatprep.subr.mxu0 0.0
  %809 = vmatpush1.msra.mxu0 0.0
  %810 = vmatprep.subr.mxu0 0.0
  %811 = vmatpush1.msra.mxu0 0.0
  %812 = vmatprep.subr.mxu0 0.0
  %813 = vmatpush1.msra.mxu0 0.0
  %814 = vmatprep.subr.mxu0 0.0
  %815 = vmatpush1.msra.mxu0 0.0
  %816 = vmatprep.subr.mxu0 0.0
  %817 = vmatpush1.msra.mxu0 0.0
  %818 = vmatprep.subr.mxu0 0.0
  %819 = vmatpush1.msra.mxu0 0.0
  %820 = vmatprep.subr.mxu0 0.0
  %821 = vmatpush1.msra.mxu0 0.0
  %822 = vmatprep.subr.mxu0 0.0
  %823 = vmatpush1.msra.mxu0 0.0
  %824 = vmatprep.subr.mxu0 0.0
  %825 = vmatpush1.msra.mxu0 0.0
  %826 = vmatprep.subr.mxu0 0.0
  %827 = vmatpush1.msra.mxu0 0.0
  %828 = vmatprep.subr.mxu0 0.0
  %829 = vmatpush1.msra.mxu0 0.0
  %830 = vmatprep.subr.mxu0 0.0
  %831 = vmatpush1.msra.mxu0 0.0
  %832 = vmatprep.subr.mxu0 0.0
  %833 = vmatpush1.msra.mxu0 0.0
  %834 = vmatprep.mubr.f32.mxu0 0.0
  %835 = vmatmul.mubr.f32.gmra.mrb[0].mxu0 %v762
  %v836 = vpop.f32.mrb[0].mxu0
  %v837 = vadd.f32 %v753, %v836
  %v838 = vpop.f32.mrb[0].mxu0
  %839 = vmatprep.mubr.f32.mxu0 0.0
  %840 = vmatmul.mubr.f32.gmra.mrb[0].mxu0 %v765
  %v841 = vpop.f32.mrb[0].mxu0
  %v842 = vadd.f32 %v758, %v841
  %v843 = vpop.f32.mrb[0].mxu0
  %844 = vdwg.mxu0
  %v845 = vmax.f32 %v837, 0.0
  %v846 = vmax.f32 %v842, 0.0
  %v847 = vadd.f32 %v745, %v845
  %v848 = vadd.f32 %v743, %v846
  %851 = vrot.lane.b32.xlu0 %v847, 9
  %v852 = vpop.permute.xlu0 %851
  %853 = vrot.lane.b32.xlu0 %v848, 9
  %v854 = vpop.permute.xlu0 %853
  %857 = vrot.lane.b32.xlu0 %v847, 8
  %v858 = vpop.permute.xlu0 %857
  %859 = vrot.lane.b32.xlu0 %v848, 8
  %v860 = vpop.permute.xlu0 %859
  %863 = vrot.lane.b32.xlu0 %v847, 7
  %v864 = vpop.permute.xlu0 %863
  %865 = vrot.lane.b32.xlu0 %v848, 7
  %v866 = vpop.permute.xlu0 %865
  %869 = vrot.lane.b32.xlu0 %v847, 1
  %v870 = vpop.permute.xlu0 %869
  %871 = vrot.lane.b32.xlu0 %v848, 1
  %v872 = vpop.permute.xlu0 %871
  %875 = vrot.lane.b32.xlu0 %v847, 127
  %v876 = vpop.permute.xlu0 %875
  %877 = vrot.lane.b32.xlu0 %v848, 127
  %v878 = vpop.permute.xlu0 %877
  %881 = vrot.lane.b32.xlu0 %v847, 121
  %v882 = vpop.permute.xlu0 %881
  %883 = vrot.lane.b32.xlu0 %v848, 121
  %v884 = vpop.permute.xlu0 %883
  %887 = vrot.lane.b32.xlu0 %v847, 120
  %v888 = vpop.permute.xlu0 %887
  %889 = vrot.lane.b32.xlu0 %v848, 120
  %v890 = vpop.permute.xlu0 %889
  %893 = vrot.lane.b32.xlu0 %v847, 119
  %v894 = vpop.permute.xlu0 %893
  %895 = vrot.lane.b32.xlu0 %v848, 119
  %v896 = vpop.permute.xlu0 %895
  %v901 = vrot.slane %v858, 7
  %v902 = vrot.slane %v860, 7
  %v903 = vsel %vm185, %v901, %v902
  %v908 = vrot.slane %v864, 6
  %v909 = vrot.slane %v866, 6
  %v910 = vsel %vm193, %v908, %v909
  %v915 = vrot.slane %v870, 5
  %v916 = vrot.slane %v872, 5
  %v917 = vsel %vm201, %v915, %v916
  %v920 = vrot.slane %v847, 4
  %v921 = vrot.slane %v848, 4
  %v922 = vsel %vm207, %v920, %v921
  %v927 = vrot.slane %v876, 3
  %v928 = vrot.slane %v878, 3
  %v929 = vsel %vm215, %v927, %v928
  %v934 = vrot.slane %v882, 2
  %v935 = vrot.slane %v884, 2
  %v936 = vsel %vm50, %v934, %v935
  %v941 = vrot.slane %v888, 1
  %v942 = vrot.slane %v890, 1
  %v943 = vsel %vm230, %v941, %v942
  %v946 = vsel %vm185, %v854, %v901
  %v947 = vsel %vm193, %v903, %v908
  %v948 = vsel %vm201, %v910, %v915
  %v949 = vsel %vm207, %v917, %v920
  %v950 = vsel %vm215, %v922, %v927
  %v951 = vsel %vm50, %v929, %v934
  %v952 = vsel %vm230, %v936, %v941
  %v953 = vmul.f32 %v852, %v11
  %v954 = vmul.f32 %v946, %v12
  %v955 = vmul.f32 %v947, %v13
  %v956 = vmul.f32 %v948, %v14
  %v957 = vmul.f32 %v949, %v15
  %v958 = vmul.f32 %v950, %v16
  %v959 = vmul.f32 %v951, %v17
  %v960 = vmul.f32 %v952, %v18
  %v961 = vmul.f32 %v943, %v19
  %v962 = vmul.f32 %v894, %v20
  %v963 = vmul.f32 %v896, %v21
  %v964 = vld [vmem:[%s1 + $0xf8] sm:$0xff]
  %v965 = vld [vmem:[%s1 + $0x100] sm:$0x1]
  %v966 = vld [vmem:[%s1 + $0x108] sm:$0xff]
  %v967 = vld [vmem:[%s1 + $0x110] sm:$0x1]
  %969 = vset.pattern.permute.xlu0 0
  %970 = vperm.xlu0 %969, %v966
  %v971 = vpop.permute.xlu0 %970
  %974 = vset.pattern.permute.xlu0 0
  %975 = vperm.xlu0 %974, %v967
  %v976 = vpop.permute.xlu0 %975
  %v979 = vsel %vm268, %v964, 0
  %v982 = vsel %vm268, %v965, 0
  %v985 = vsel %vm185, %v963, 0
  %987 = vmatprep.subr.mxu0 0.0
  %988 = vmatpush1.msra.mxu0 %v953
  %989 = vmatprep.subr.mxu0 0.0
  %990 = vmatpush1.msra.mxu0 %v954
  %991 = vmatprep.subr.mxu0 0.0
  %992 = vmatpush1.msra.mxu0 %v955
  %993 = vmatprep.subr.mxu0 0.0
  %994 = vmatpush1.msra.mxu0 %v956
  %995 = vmatprep.subr.mxu0 0.0
  %996 = vmatpush1.msra.mxu0 %v957
  %997 = vmatprep.subr.mxu0 0.0
  %998 = vmatpush1.msra.mxu0 %v958
  %999 = vmatprep.subr.mxu0 0.0
  %1000 = vmatpush1.msra.mxu0 %v959
  %1001 = vmatprep.subr.mxu0 0.0
  %1002 = vmatpush1.msra.mxu0 %v960
  %1003 = vmatprep.subr.mxu0 0.0
  %1004 = vmatpush1.msra.mxu0 %v961
  %1005 = vmatprep.subr.mxu0 0.0
  %1006 = vmatpush1.msra.mxu0 %v962
  %1007 = vmatprep.subr.mxu0 0.0
  %1008 = vmatpush1.msra.mxu0 %v985
  %1009 = vmatprep.subr.mxu0 0.0
  %1010 = vmatpush1.msra.mxu0 0.0
  %1011 = vmatprep.subr.mxu0 0.0
  %1012 = vmatpush1.msra.mxu0 0.0
  %1013 = vmatprep.subr.mxu0 0.0
  %1014 = vmatpush1.msra.mxu0 0.0
  %1015 = vmatprep.subr.mxu0 0.0
  %1016 = vmatpush1.msra.mxu0 0.0
  %1017 = vmatprep.subr.mxu0 0.0
  %1018 = vmatpush1.msra.mxu0 0.0
  %1019 = vmatprep.subr.mxu0 0.0
  %1020 = vmatpush1.msra.mxu0 0.0
  %1021 = vmatprep.subr.mxu0 0.0
  %1022 = vmatpush1.msra.mxu0 0.0
  %1023 = vmatprep.subr.mxu0 0.0
  %1024 = vmatpush1.msra.mxu0 0.0
  %1025 = vmatprep.subr.mxu0 0.0
  %1026 = vmatpush1.msra.mxu0 0.0
  %1027 = vmatprep.subr.mxu0 0.0
  %1028 = vmatpush1.msra.mxu0 0.0
  %1029 = vmatprep.subr.mxu0 0.0
  %1030 = vmatpush1.msra.mxu0 0.0
  %1031 = vmatprep.subr.mxu0 0.0
  %1032 = vmatpush1.msra.mxu0 0.0
  %1033 = vmatprep.subr.mxu0 0.0
  %1034 = vmatpush1.msra.mxu0 0.0
  %1035 = vmatprep.subr.mxu0 0.0
  %1036 = vmatpush1.msra.mxu0 0.0
  %1037 = vmatprep.subr.mxu0 0.0
  %1038 = vmatpush1.msra.mxu0 0.0
  %1039 = vmatprep.subr.mxu0 0.0
  %1040 = vmatpush1.msra.mxu0 0.0
  %1041 = vmatprep.subr.mxu0 0.0
  %1042 = vmatpush1.msra.mxu0 0.0
  %1043 = vmatprep.subr.mxu0 0.0
  %1044 = vmatpush1.msra.mxu0 0.0
  %1045 = vmatprep.subr.mxu0 0.0
  %1046 = vmatpush1.msra.mxu0 0.0
  %1047 = vmatprep.subr.mxu0 0.0
  %1048 = vmatpush1.msra.mxu0 0.0
  %1049 = vmatprep.subr.mxu0 0.0
  %1050 = vmatpush1.msra.mxu0 0.0
  %1051 = vmatprep.mubr.f32.mxu0 0.0
  %1052 = vmatmul.mubr.f32.gmra.mrb[0].mxu0 %v979
  %v1053 = vpop.f32.mrb[0].mxu0
  %v1054 = vadd.f32 %v971, %v1053
  %v1055 = vpop.f32.mrb[0].mxu0
  %1056 = vmatprep.mubr.f32.mxu0 0.0
  %1057 = vmatmul.mubr.f32.gmra.mrb[0].mxu0 %v982
  %v1058 = vpop.f32.mrb[0].mxu0
  %v1059 = vadd.f32 %v976, %v1058
  %v1060 = vpop.f32.mrb[0].mxu0
  %1061 = vdwg.mxu0
  %v1062 = vmax.f32 %v1054, 0.0
  %v1063 = vmax.f32 %v1059, 0.0
  %1066 = vrot.lane.b32.xlu0 %v1062, 9
  %v1067 = vpop.permute.xlu0 %1066
  %1068 = vrot.lane.b32.xlu0 %v1063, 9
  %v1069 = vpop.permute.xlu0 %1068
  %1072 = vrot.lane.b32.xlu0 %v1062, 8
  %v1073 = vpop.permute.xlu0 %1072
  %1074 = vrot.lane.b32.xlu0 %v1063, 8
  %v1075 = vpop.permute.xlu0 %1074
  %1078 = vrot.lane.b32.xlu0 %v1062, 7
  %v1079 = vpop.permute.xlu0 %1078
  %1080 = vrot.lane.b32.xlu0 %v1063, 7
  %v1081 = vpop.permute.xlu0 %1080
  %1084 = vrot.lane.b32.xlu0 %v1062, 1
  %v1085 = vpop.permute.xlu0 %1084
  %1086 = vrot.lane.b32.xlu0 %v1063, 1
  %v1087 = vpop.permute.xlu0 %1086
  %1090 = vrot.lane.b32.xlu0 %v1062, 127
  %v1091 = vpop.permute.xlu0 %1090
  %1092 = vrot.lane.b32.xlu0 %v1063, 127
  %v1093 = vpop.permute.xlu0 %1092
  %1096 = vrot.lane.b32.xlu0 %v1062, 121
  %v1097 = vpop.permute.xlu0 %1096
  %1098 = vrot.lane.b32.xlu0 %v1063, 121
  %v1099 = vpop.permute.xlu0 %1098
  %1102 = vrot.lane.b32.xlu0 %v1062, 120
  %v1103 = vpop.permute.xlu0 %1102
  %1104 = vrot.lane.b32.xlu0 %v1063, 120
  %v1105 = vpop.permute.xlu0 %1104
  %1108 = vrot.lane.b32.xlu0 %v1062, 119
  %v1109 = vpop.permute.xlu0 %1108
  %1110 = vrot.lane.b32.xlu0 %v1063, 119
  %v1111 = vpop.permute.xlu0 %1110
  %v1116 = vrot.slane %v1073, 7
  %v1117 = vrot.slane %v1075, 7
  %v1118 = vsel %vm185, %v1116, %v1117
  %v1123 = vrot.slane %v1079, 6
  %v1124 = vrot.slane %v1081, 6
  %v1125 = vsel %vm193, %v1123, %v1124
  %v1130 = vrot.slane %v1085, 5
  %v1131 = vrot.slane %v1087, 5
  %v1132 = vsel %vm201, %v1130, %v1131
  %v1135 = vrot.slane %v1062, 4
  %v1136 = vrot.slane %v1063, 4
  %v1137 = vsel %vm207, %v1135, %v1136
  %v1142 = vrot.slane %v1091, 3
  %v1143 = vrot.slane %v1093, 3
  %v1144 = vsel %vm215, %v1142, %v1143
  %v1149 = vrot.slane %v1097, 2
  %v1150 = vrot.slane %v1099, 2
  %v1151 = vsel %vm50, %v1149, %v1150
  %v1156 = vrot.slane %v1103, 1
  %v1157 = vrot.slane %v1105, 1
  %v1158 = vsel %vm230, %v1156, %v1157
  %v1161 = vsel %vm185, %v1069, %v1116
  %v1162 = vsel %vm193, %v1118, %v1123
  %v1163 = vsel %vm201, %v1125, %v1130
  %v1164 = vsel %vm207, %v1132, %v1135
  %v1165 = vsel %vm215, %v1137, %v1142
  %v1166 = vsel %vm50, %v1144, %v1149
  %v1167 = vsel %vm230, %v1151, %v1156
  %v1168 = vmul.f32 %v1067, %v11
  %v1169 = vmul.f32 %v1161, %v12
  %v1170 = vmul.f32 %v1162, %v13
  %v1171 = vmul.f32 %v1163, %v14
  %v1172 = vmul.f32 %v1164, %v15
  %v1173 = vmul.f32 %v1165, %v16
  %v1174 = vmul.f32 %v1166, %v17
  %v1175 = vmul.f32 %v1167, %v18
  %v1176 = vmul.f32 %v1158, %v19
  %v1177 = vmul.f32 %v1109, %v20
  %v1178 = vmul.f32 %v1111, %v21
  %v1179 = vld [vmem:[%s1 + $0x118] sm:$0xff]
  %v1180 = vld [vmem:[%s1 + $0x120] sm:$0x1]
  %v1181 = vld [vmem:[%s1 + $0x128] sm:$0xff]
  %v1182 = vld [vmem:[%s1 + $0x130] sm:$0x1]
  %1184 = vset.pattern.permute.xlu0 0
  %1185 = vperm.xlu0 %1184, %v1181
  %v1186 = vpop.permute.xlu0 %1185
  %1189 = vset.pattern.permute.xlu0 0
  %1190 = vperm.xlu0 %1189, %v1182
  %v1191 = vpop.permute.xlu0 %1190
  %v1194 = vsel %vm268, %v1179, 0
  %v1197 = vsel %vm268, %v1180, 0
  %v1200 = vsel %vm185, %v1178, 0
  %1202 = vmatprep.subr.mxu0 0.0
  %1203 = vmatpush1.msra.mxu0 %v1168
  %1204 = vmatprep.subr.mxu0 0.0
  %1205 = vmatpush1.msra.mxu0 %v1169
  %1206 = vmatprep.subr.mxu0 0.0
  %1207 = vmatpush1.msra.mxu0 %v1170
  %1208 = vmatprep.subr.mxu0 0.0
  %1209 = vmatpush1.msra.mxu0 %v1171
  %1210 = vmatprep.subr.mxu0 0.0
  %1211 = vmatpush1.msra.mxu0 %v1172
  %1212 = vmatprep.subr.mxu0 0.0
  %1213 = vmatpush1.msra.mxu0 %v1173
  %1214 = vmatprep.subr.mxu0 0.0
  %1215 = vmatpush1.msra.mxu0 %v1174
  %1216 = vmatprep.subr.mxu0 0.0
  %1217 = vmatpush1.msra.mxu0 %v1175
  %1218 = vmatprep.subr.mxu0 0.0
  %1219 = vmatpush1.msra.mxu0 %v1176
  %1220 = vmatprep.subr.mxu0 0.0
  %1221 = vmatpush1.msra.mxu0 %v1177
  %1222 = vmatprep.subr.mxu0 0.0
  %1223 = vmatpush1.msra.mxu0 %v1200
  %1224 = vmatprep.subr.mxu0 0.0
  %1225 = vmatpush1.msra.mxu0 0.0
  %1226 = vmatprep.subr.mxu0 0.0
  %1227 = vmatpush1.msra.mxu0 0.0
  %1228 = vmatprep.subr.mxu0 0.0
  %1229 = vmatpush1.msra.mxu0 0.0
  %1230 = vmatprep.subr.mxu0 0.0
  %1231 = vmatpush1.msra.mxu0 0.0
  %1232 = vmatprep.subr.mxu0 0.0
  %1233 = vmatpush1.msra.mxu0 0.0
  %1234 = vmatprep.subr.mxu0 0.0
  %1235 = vmatpush1.msra.mxu0 0.0
  %1236 = vmatprep.subr.mxu0 0.0
  %1237 = vmatpush1.msra.mxu0 0.0
  %1238 = vmatprep.subr.mxu0 0.0
  %1239 = vmatpush1.msra.mxu0 0.0
  %1240 = vmatprep.subr.mxu0 0.0
  %1241 = vmatpush1.msra.mxu0 0.0
  %1242 = vmatprep.subr.mxu0 0.0
  %1243 = vmatpush1.msra.mxu0 0.0
  %1244 = vmatprep.subr.mxu0 0.0
  %1245 = vmatpush1.msra.mxu0 0.0
  %1246 = vmatprep.subr.mxu0 0.0
  %1247 = vmatpush1.msra.mxu0 0.0
  %1248 = vmatprep.subr.mxu0 0.0
  %1249 = vmatpush1.msra.mxu0 0.0
  %1250 = vmatprep.subr.mxu0 0.0
  %1251 = vmatpush1.msra.mxu0 0.0
  %1252 = vmatprep.subr.mxu0 0.0
  %1253 = vmatpush1.msra.mxu0 0.0
  %1254 = vmatprep.subr.mxu0 0.0
  %1255 = vmatpush1.msra.mxu0 0.0
  %1256 = vmatprep.subr.mxu0 0.0
  %1257 = vmatpush1.msra.mxu0 0.0
  %1258 = vmatprep.subr.mxu0 0.0
  %1259 = vmatpush1.msra.mxu0 0.0
  %1260 = vmatprep.subr.mxu0 0.0
  %1261 = vmatpush1.msra.mxu0 0.0
  %1262 = vmatprep.subr.mxu0 0.0
  %1263 = vmatpush1.msra.mxu0 0.0
  %1264 = vmatprep.subr.mxu0 0.0
  %1265 = vmatpush1.msra.mxu0 0.0
  %1266 = vmatprep.mubr.f32.mxu0 0.0
  %1267 = vmatmul.mubr.f32.gmra.mrb[0].mxu0 %v1194
  %v1268 = vpop.f32.mrb[0].mxu0
  %v1269 = vadd.f32 %v1186, %v1268
  %v1270 = vpop.f32.mrb[0].mxu0
  %1271 = vmatprep.mubr.f32.mxu0 0.0
  %1272 = vmatmul.mubr.f32.gmra.mrb[0].mxu0 %v1197
  %v1273 = vpop.f32.mrb[0].mxu0
  %v1274 = vadd.f32 %v1191, %v1273
  %v1275 = vpop.f32.mrb[0].mxu0
  %1276 = vdwg.mxu0
  %v1277 = vmax.f32 %v1269, 0.0
  %v1278 = vmax.f32 %v1274, 0.0
  %v1279 = vld [vmem:[%s1 + $0x138] sm:$0xff]
  %v1280 = vld [vmem:[%s1 + $0x140] sm:$0x1]
  %v1281 = vld [vmem:[%s1 + $0x148] sm:$0xff]
  %v1282 = vld [vmem:[%s1 + $0x150] sm:$0x1]
  %v1283 = vld [vmem:[%s1 + $0x158] sm:$0x7]
  %v1284 = vld [vmem:[%s1 + $0x160] sm:$0xff]
  %v1285 = vld [vmem:[%s1 + $0x168] sm:$0x1]
  %v1286 = vmul.f32 %v1277, %v1279
  %v1287 = vmul.f32 %v1278, %v1280
  %v1288 = vsel %vm364, %v1286, 0.0
  %1289 = vadd.xlane.f32.xlu0 %v1288
  %v1290 = vpop.xlane.xlu0 %1289
  %v1291 = vsel %vm368, %v1287, 0.0
  %1292 = vadd.xlane.f32.xlu0 %v1291
  %v1293 = vpop.xlane.xlu0 %1292
  %1296 = vrot.lane.b32.xlu0 %v1279, 64
  %v1297 = vpop.permute.xlu0 %1296
  %1298 = vrot.lane.b32.xlu0 %v1280, 64
  %v1299 = vpop.permute.xlu0 %1298
  %v1302 = vmul.f32 %v1277, %v1297
  %v1303 = vmul.f32 %v1278, %v1299
  %1306 = vrot.lane.b32.xlu0 %v1302, 64
  %v1307 = vpop.permute.xlu0 %1306
  %1308 = vrot.lane.b32.xlu0 %v1303, 64
  %v1309 = vpop.permute.xlu0 %1308
  %v1312 = vsel %vm364, %v1307, 0.0
  %1313 = vadd.xlane.f32.xlu0 %v1312
  %v1314 = vpop.xlane.xlu0 %1313
  %v1315 = vsel %vm368, %v1309, 0.0
  %1316 = vadd.xlane.f32.xlu0 %v1315
  %v1317 = vpop.xlane.xlu0 %1316
  %v1318 = vmul.f32 %v1277, %v1281
  %v1319 = vmul.f32 %v1278, %v1282
  %v1320 = vsel %vm364, %v1318, 0.0
  %1321 = vadd.xlane.f32.xlu0 %v1320
  %v1322 = vpop.xlane.xlu0 %1321
  %v1323 = vsel %vm368, %v1319, 0.0
  %1324 = vadd.xlane.f32.xlu0 %v1323
  %v1325 = vpop.xlane.xlu0 %1324
  %1328 = vrot.lane.b32.xlu0 %v1281, 64
  %v1329 = vpop.permute.xlu0 %1328
  %1330 = vrot.lane.b32.xlu0 %v1282, 64
  %v1331 = vpop.permute.xlu0 %1330
  %v1334 = vmul.f32 %v1277, %v1329
  %v1335 = vmul.f32 %v1278, %v1331
  %1338 = vrot.lane.b32.xlu0 %v1334, 64
  %v1339 = vpop.permute.xlu0 %1338
  %1340 = vrot.lane.b32.xlu0 %v1335, 64
  %v1341 = vpop.permute.xlu0 %1340
  %v1344 = vsel %vm364, %v1339, 0.0
  %1345 = vadd.xlane.f32.xlu0 %v1344
  %v1346 = vpop.xlane.xlu0 %1345
  %v1347 = vsel %vm368, %v1341, 0.0
  %1348 = vadd.xlane.f32.xlu0 %v1347
  %v1349 = vpop.xlane.xlu0 %1348
  %v1350 = vsel %vm158, %v1290, %v1314
  %v1351 = vsel %vm158, %v1293, %v1317
  %v1352 = vsel %vm430, %v1350, %v1322
  %v1353 = vsel %vm430, %v1351, %v1325
  %v1354 = vsel %vm433, %v1352, %v1346
  %v1355 = vsel %vm433, %v1353, %v1349
  %v1357 = vsel %vm139, %v1283, 0
  %v1360 = vsel %vm185, %v1355, 0
  %1362 = vmatprep.subr.mxu0 0.0
  %1363 = vmatpush1.msra.mxu0 %v1354
  %1364 = vmatprep.subr.mxu0 0.0
  %1365 = vmatpush1.msra.mxu0 %v1360
  %1366 = vmatprep.subr.mxu0 0.0
  %1367 = vmatpush1.msra.mxu0 0.0
  %1368 = vmatprep.subr.mxu0 0.0
  %1369 = vmatpush1.msra.mxu0 0.0
  %1370 = vmatprep.subr.mxu0 0.0
  %1371 = vmatpush1.msra.mxu0 0.0
  %1372 = vmatprep.subr.mxu0 0.0
  %1373 = vmatpush1.msra.mxu0 0.0
  %1374 = vmatprep.subr.mxu0 0.0
  %1375 = vmatpush1.msra.mxu0 0.0
  %1376 = vmatprep.subr.mxu0 0.0
  %1377 = vmatpush1.msra.mxu0 0.0
  %1378 = vmatprep.subr.mxu0 0.0
  %1379 = vmatpush1.msra.mxu0 0.0
  %1380 = vmatprep.subr.mxu0 0.0
  %1381 = vmatpush1.msra.mxu0 0.0
  %1382 = vmatprep.subr.mxu0 0.0
  %1383 = vmatpush1.msra.mxu0 0.0
  %1384 = vmatprep.subr.mxu0 0.0
  %1385 = vmatpush1.msra.mxu0 0.0
  %1386 = vmatprep.subr.mxu0 0.0
  %1387 = vmatpush1.msra.mxu0 0.0
  %1388 = vmatprep.subr.mxu0 0.0
  %1389 = vmatpush1.msra.mxu0 0.0
  %1390 = vmatprep.subr.mxu0 0.0
  %1391 = vmatpush1.msra.mxu0 0.0
  %1392 = vmatprep.subr.mxu0 0.0
  %1393 = vmatpush1.msra.mxu0 0.0
  %1394 = vmatprep.subr.mxu0 0.0
  %1395 = vmatpush1.msra.mxu0 0.0
  %1396 = vmatprep.subr.mxu0 0.0
  %1397 = vmatpush1.msra.mxu0 0.0
  %1398 = vmatprep.subr.mxu0 0.0
  %1399 = vmatpush1.msra.mxu0 0.0
  %1400 = vmatprep.subr.mxu0 0.0
  %1401 = vmatpush1.msra.mxu0 0.0
  %1402 = vmatprep.subr.mxu0 0.0
  %1403 = vmatpush1.msra.mxu0 0.0
  %1404 = vmatprep.subr.mxu0 0.0
  %1405 = vmatpush1.msra.mxu0 0.0
  %1406 = vmatprep.subr.mxu0 0.0
  %1407 = vmatpush1.msra.mxu0 0.0
  %1408 = vmatprep.subr.mxu0 0.0
  %1409 = vmatpush1.msra.mxu0 0.0
  %1410 = vmatprep.subr.mxu0 0.0
  %1411 = vmatpush1.msra.mxu0 0.0
  %1412 = vmatprep.subr.mxu0 0.0
  %1413 = vmatpush1.msra.mxu0 0.0
  %1414 = vmatprep.subr.mxu0 0.0
  %1415 = vmatpush1.msra.mxu0 0.0
  %1416 = vmatprep.subr.mxu0 0.0
  %1417 = vmatpush1.msra.mxu0 0.0
  %1418 = vmatprep.subr.mxu0 0.0
  %1419 = vmatpush1.msra.mxu0 0.0
  %1420 = vmatprep.subr.mxu0 0.0
  %1421 = vmatpush1.msra.mxu0 0.0
  %1422 = vmatprep.subr.mxu0 0.0
  %1423 = vmatpush1.msra.mxu0 0.0
  %1424 = vmatprep.subr.mxu0 0.0
  %1425 = vmatpush1.msra.mxu0 0.0
  %1426 = vmatprep.mubr.f32.mxu0 0.0
  %1427 = vmatmul.mubr.f32.gmra.mrb[0].mxu0 %v1357
  %v1428 = vpop.f32.mrb[0].mxu0
  %v1429 = vadd.f32 0.0, %v1428
  %v1430 = vpop.f32.mrb[0].mxu0
  %1431 = vdwg.mxu0
  %v1432 = vmax.f32 %v1429, 0.0
  %v1434 = vsel %vm433, %v1284, 0
  %v1437 = vsel %vm433, %v1285, 0
  %v1440 = vsel %vm201, %v1432, 0
  %1442 = vmatprep.subr.mxu0 0.0
  %1443 = vmatpush1.msra.mxu0 %v1440
  %1444 = vmatprep.subr.mxu0 0.0
  %1445 = vmatpush1.msra.mxu0 0.0
  %1446 = vmatprep.subr.mxu0 0.0
  %1447 = vmatpush1.msra.mxu0 0.0
  %1448 = vmatprep.subr.mxu0 0.0
  %1449 = vmatpush1.msra.mxu0 0.0
  %1450 = vmatprep.subr.mxu0 0.0
  %1451 = vmatpush1.msra.mxu0 0.0
  %1452 = vmatprep.subr.mxu0 0.0
  %1453 = vmatpush1.msra.mxu0 0.0
  %1454 = vmatprep.subr.mxu0 0.0
  %1455 = vmatpush1.msra.mxu0 0.0
  %1456 = vmatprep.subr.mxu0 0.0
  %1457 = vmatpush1.msra.mxu0 0.0
  %1458 = vmatprep.subr.mxu0 0.0
  %1459 = vmatpush1.msra.mxu0 0.0
  %1460 = vmatprep.subr.mxu0 0.0
  %1461 = vmatpush1.msra.mxu0 0.0
  %1462 = vmatprep.subr.mxu0 0.0
  %1463 = vmatpush1.msra.mxu0 0.0
  %1464 = vmatprep.subr.mxu0 0.0
  %1465 = vmatpush1.msra.mxu0 0.0
  %1466 = vmatprep.subr.mxu0 0.0
  %1467 = vmatpush1.msra.mxu0 0.0
  %1468 = vmatprep.subr.mxu0 0.0
  %1469 = vmatpush1.msra.mxu0 0.0
  %1470 = vmatprep.subr.mxu0 0.0
  %1471 = vmatpush1.msra.mxu0 0.0
  %1472 = vmatprep.subr.mxu0 0.0
  %1473 = vmatpush1.msra.mxu0 0.0
  %1474 = vmatprep.subr.mxu0 0.0
  %1475 = vmatpush1.msra.mxu0 0.0
  %1476 = vmatprep.subr.mxu0 0.0
  %1477 = vmatpush1.msra.mxu0 0.0
  %1478 = vmatprep.subr.mxu0 0.0
  %1479 = vmatpush1.msra.mxu0 0.0
  %1480 = vmatprep.subr.mxu0 0.0
  %1481 = vmatpush1.msra.mxu0 0.0
  %1482 = vmatprep.subr.mxu0 0.0
  %1483 = vmatpush1.msra.mxu0 0.0
  %1484 = vmatprep.subr.mxu0 0.0
  %1485 = vmatpush1.msra.mxu0 0.0
  %1486 = vmatprep.subr.mxu0 0.0
  %1487 = vmatpush1.msra.mxu0 0.0
  %1488 = vmatprep.subr.mxu0 0.0
  %1489 = vmatpush1.msra.mxu0 0.0
  %1490 = vmatprep.subr.mxu0 0.0
  %1491 = vmatpush1.msra.mxu0 0.0
  %1492 = vmatprep.subr.mxu0 0.0
  %1493 = vmatpush1.msra.mxu0 0.0
  %1494 = vmatprep.subr.mxu0 0.0
  %1495 = vmatpush1.msra.mxu0 0.0
  %1496 = vmatprep.subr.mxu0 0.0
  %1497 = vmatpush1.msra.mxu0 0.0
  %1498 = vmatprep.subr.mxu0 0.0
  %1499 = vmatpush1.msra.mxu0 0.0
  %1500 = vmatprep.subr.mxu0 0.0
  %1501 = vmatpush1.msra.mxu0 0.0
  %1502 = vmatprep.subr.mxu0 0.0
  %1503 = vmatpush1.msra.mxu0 0.0
  %1504 = vmatprep.subr.mxu0 0.0
  %1505 = vmatpush1.msra.mxu0 0.0
  %1506 = vmatprep.mubr.f32.mxu0 0.0
  %1507 = vmatmul.mubr.f32.gmra.mrb[0].mxu0 %v1434
  %v1508 = vpop.f32.mrb[0].mxu0
  %v1509 = vadd.f32 0.0, %v1508
  %v1510 = vpop.f32.mrb[0].mxu0
  %1511 = vmatprep.mubr.f32.mxu0 0.0
  %1512 = vmatmul.mubr.f32.gmra.mrb[0].mxu0 %v1437
  %v1513 = vpop.f32.mrb[0].mxu0
  %v1514 = vadd.f32 0.0, %v1513
  %v1515 = vpop.f32.mrb[0].mxu0
  %1516 = vdwg.mxu0
  %v1517 = vmul.f32 %v1509, 2.0
  %v1518 = vmul.f32 %v1514, 2.0
  %1521 = vrot.lane.b32.xlu0 %v1517, 126
  %v1522 = vpop.permute.xlu0 %1521
  %1523 = vrot.lane.b32.xlu0 %v1518, 126
  %v1524 = vpop.permute.xlu0 %1523
  %v1527 = vadd.f32 %v1509, %v1522
  %v1528 = vadd.f32 %v1514, %v1524
  %v1529 = vxor.u32 %v1527, 2147483648
  %v1530 = vxor.u32 %v1528, 2147483648
  %v1531 = vmul.f32 %v1529, 1.442695
  %v1532 = vpow.pop %v1531
  %v1533 = vmul.f32 %v1530, 1.442695
  %v1534 = vpow.pop %v1533
  %v1535 = vadd.f32 %v1532, 1.0
  %v1536 = vadd.f32 %v1534, 1.0
  %v1537 = vrcp.pop %v1535
  %v1538 = vmul.f32 1.0, %v1537
  %v1539 = vrcp.pop %v1536
  %v1540 = vmul.f32 1.0, %v1539
  %1542 = vset.pattern.permute.xlu0 0
  %1543 = vperm.xlu0 %1542, %v1538
  %v1544 = vpop.permute.xlu0 %1543
  %1547 = vset.pattern.permute.xlu0 0
  %1548 = vperm.xlu0 %1547, %v1540
  %v1549 = vpop.permute.xlu0 %1548
  %v1551 = vmul.f32 %v1277, %v1544
  %v1552 = vmul.f32 %v1278, %v1549
  %1553 = vset.pattern.permute.xlu0 1
  %1554 = vperm.xlu0 %1553, %v1538
  %v1555 = vpop.permute.xlu0 %1554
  %1557 = vset.pattern.permute.xlu0 1
  %1558 = vperm.xlu0 %1557, %v1540
  %v1559 = vpop.permute.xlu0 %1558
  %v1561 = vmul.f32 %v1277, %v1555
  %v1562 = vmul.f32 %v1278, %v1559
  %v1563 = vsel %vm364, %v1551, %v1561
  %v1564 = vsel %vm364, %v1552, %v1562
  %v1565 = vld [vmem:[%s1 + $0x170] sm:$0x7]
  %v1567 = vsel %vm139, %v1565, 0
  %v1570 = vsel %vm185, %v1564, 0
  %1572 = vmatprep.subr.mxu0 0.0
  %1573 = vmatpush1.msra.mxu0 %v1563
  %1574 = vmatprep.subr.mxu0 0.0
  %1575 = vmatpush1.msra.mxu0 %v1570
  %1576 = vmatprep.subr.mxu0 0.0
  %1577 = vmatpush1.msra.mxu0 0.0
  %1578 = vmatprep.subr.mxu0 0.0
  %1579 = vmatpush1.msra.mxu0 0.0
  %1580 = vmatprep.subr.mxu0 0.0
  %1581 = vmatpush1.msra.mxu0 0.0
  %1582 = vmatprep.subr.mxu0 0.0
  %1583 = vmatpush1.msra.mxu0 0.0
  %1584 = vmatprep.subr.mxu0 0.0
  %1585 = vmatpush1.msra.mxu0 0.0
  %1586 = vmatprep.subr.mxu0 0.0
  %1587 = vmatpush1.msra.mxu0 0.0
  %1588 = vmatprep.subr.mxu0 0.0
  %1589 = vmatpush1.msra.mxu0 0.0
  %1590 = vmatprep.subr.mxu0 0.0
  %1591 = vmatpush1.msra.mxu0 0.0
  %1592 = vmatprep.subr.mxu0 0.0
  %1593 = vmatpush1.msra.mxu0 0.0
  %1594 = vmatprep.subr.mxu0 0.0
  %1595 = vmatpush1.msra.mxu0 0.0
  %1596 = vmatprep.subr.mxu0 0.0
  %1597 = vmatpush1.msra.mxu0 0.0
  %1598 = vmatprep.subr.mxu0 0.0
  %1599 = vmatpush1.msra.mxu0 0.0
  %1600 = vmatprep.subr.mxu0 0.0
  %1601 = vmatpush1.msra.mxu0 0.0
  %1602 = vmatprep.subr.mxu0 0.0
  %1603 = vmatpush1.msra.mxu0 0.0
  %1604 = vmatprep.subr.mxu0 0.0
  %1605 = vmatpush1.msra.mxu0 0.0
  %1606 = vmatprep.subr.mxu0 0.0
  %1607 = vmatpush1.msra.mxu0 0.0
  %1608 = vmatprep.subr.mxu0 0.0
  %1609 = vmatpush1.msra.mxu0 0.0
  %1610 = vmatprep.subr.mxu0 0.0
  %1611 = vmatpush1.msra.mxu0 0.0
  %1612 = vmatprep.subr.mxu0 0.0
  %1613 = vmatpush1.msra.mxu0 0.0
  %1614 = vmatprep.subr.mxu0 0.0
  %1615 = vmatpush1.msra.mxu0 0.0
  %1616 = vmatprep.subr.mxu0 0.0
  %1617 = vmatpush1.msra.mxu0 0.0
  %1618 = vmatprep.subr.mxu0 0.0
  %1619 = vmatpush1.msra.mxu0 0.0
  %1620 = vmatprep.subr.mxu0 0.0
  %1621 = vmatpush1.msra.mxu0 0.0
  %1622 = vmatprep.subr.mxu0 0.0
  %1623 = vmatpush1.msra.mxu0 0.0
  %1624 = vmatprep.subr.mxu0 0.0
  %1625 = vmatpush1.msra.mxu0 0.0
  %1626 = vmatprep.subr.mxu0 0.0
  %1627 = vmatpush1.msra.mxu0 0.0
  %1628 = vmatprep.subr.mxu0 0.0
  %1629 = vmatpush1.msra.mxu0 0.0
  %1630 = vmatprep.subr.mxu0 0.0
  %1631 = vmatpush1.msra.mxu0 0.0
  %1632 = vmatprep.subr.mxu0 0.0
  %1633 = vmatpush1.msra.mxu0 0.0
  %1634 = vmatprep.subr.mxu0 0.0
  %1635 = vmatpush1.msra.mxu0 0.0
  %1636 = vmatprep.mubr.f32.mxu0 0.0
  %1637 = vmatmul.mubr.f32.gmra.mrb[0].mxu0 %v1567
  %v1638 = vpop.f32.mrb[0].mxu0
  %v1639 = vadd.f32 0.0, %v1638
  %v1640 = vpop.f32.mrb[0].mxu0
  %1641 = vdwg.mxu0
  %v1642 = vxor.u32 %v1639, 2147483648
  %v1643 = vmul.f32 %v1642, 1.442695
  %v1644 = vpow.pop %v1643
  %v1645 = vadd.f32 %v1644, 1.0
  %v1646 = vrcp.pop %v1645
  %v1647 = vmul.f32 1.0, %v1646
  %v1648 = vlaneseq
  %v1649 = vshrl.u32 %v1648, 7
  %v1650 = vsub.s32 0, %v1649
  %v1651 = vrot.slane %v1647, %v1650
  %v1652 = vmul.f32 %v1563, %v1651
  %v1653 = vlaneseq
  %v1654 = vshrl.u32 %v1653, 7
  %v1655 = vsub.s32 1, %v1654
  %v1656 = vrot.slane %v1647, %v1655
  %v1657 = vmul.f32 %v1563, %v1656
  %v1658 = vlaneseq
  %v1659 = vshrl.u32 %v1658, 7
  %v1660 = vsub.s32 2, %v1659
  %v1661 = vrot.slane %v1647, %v1660
  %v1662 = vmul.f32 %v1563, %v1661
  %v1663 = vmul.f32 %v1564, %v1661
  %v1664 = vsel %vm201, %v1652, %v1657
  %v1665 = vsel %vm50, %v1664, %v1662
  %v1666 = vadd.f32 %v1665, %v847
  %v1667 = vadd.f32 %v1663, %v848
  %1670 = vrot.lane.b32.xlu0 %v1666, 9
  %v1671 = vpop.permute.xlu0 %1670
  %1672 = vrot.lane.b32.xlu0 %v1667, 9
  %v1673 = vpop.permute.xlu0 %1672
  %1676 = vrot.lane.b32.xlu0 %v1666, 8
  %v1677 = vpop.permute.xlu0 %1676
  %1678 = vrot.lane.b32.xlu0 %v1667, 8
  %v1679 = vpop.permute.xlu0 %1678
  %1682 = vrot.lane.b32.xlu0 %v1666, 7
  %v1683 = vpop.permute.xlu0 %1682
  %1684 = vrot.lane.b32.xlu0 %v1667, 7
  %v1685 = vpop.permute.xlu0 %1684
  %1688 = vrot.lane.b32.xlu0 %v1666, 1
  %v1689 = vpop.permute.xlu0 %1688
  %1690 = vrot.lane.b32.xlu0 %v1667, 1
  %v1691 = vpop.permute.xlu0 %1690
  %1694 = vrot.lane.b32.xlu0 %v1666, 127
  %v1695 = vpop.permute.xlu0 %1694
  %1696 = vrot.lane.b32.xlu0 %v1667, 127
  %v1697 = vpop.permute.xlu0 %1696
  %1700 = vrot.lane.b32.xlu0 %v1666, 121
  %v1701 = vpop.permute.xlu0 %1700
  %1702 = vrot.lane.b32.xlu0 %v1667, 121
  %v1703 = vpop.permute.xlu0 %1702
  %1706 = vrot.lane.b32.xlu0 %v1666, 120
  %v1707 = vpop.permute.xlu0 %1706
  %1708 = vrot.lane.b32.xlu0 %v1667, 120
  %v1709 = vpop.permute.xlu0 %1708
  %1712 = vrot.lane.b32.xlu0 %v1666, 119
  %v1713 = vpop.permute.xlu0 %1712
  %1714 = vrot.lane.b32.xlu0 %v1667, 119
  %v1715 = vpop.permute.xlu0 %1714
  %v1720 = vrot.slane %v1677, 7
  %v1721 = vrot.slane %v1679, 7
  %v1722 = vsel %vm185, %v1720, %v1721
  %v1727 = vrot.slane %v1683, 6
  %v1728 = vrot.slane %v1685, 6
  %v1729 = vsel %vm193, %v1727, %v1728
  %v1734 = vrot.slane %v1689, 5
  %v1735 = vrot.slane %v1691, 5
  %v1736 = vsel %vm201, %v1734, %v1735
  %v1739 = vrot.slane %v1666, 4
  %v1740 = vrot.slane %v1667, 4
  %v1741 = vsel %vm207, %v1739, %v1740
  %v1746 = vrot.slane %v1695, 3
  %v1747 = vrot.slane %v1697, 3
  %v1748 = vsel %vm215, %v1746, %v1747
  %v1753 = vrot.slane %v1701, 2
  %v1754 = vrot.slane %v1703, 2
  %v1755 = vsel %vm50, %v1753, %v1754
  %v1760 = vrot.slane %v1707, 1
  %v1761 = vrot.slane %v1709, 1
  %v1762 = vsel %vm230, %v1760, %v1761
  %v1765 = vsel %vm185, %v1673, %v1720
  %v1766 = vsel %vm193, %v1722, %v1727
  %v1767 = vsel %vm201, %v1729, %v1734
  %v1768 = vsel %vm207, %v1736, %v1739
  %v1769 = vsel %vm215, %v1741, %v1746
  %v1770 = vsel %vm50, %v1748, %v1753
  %v1771 = vsel %vm230, %v1755, %v1760
  %v1772 = vmul.f32 %v1671, %v11
  %v1773 = vmul.f32 %v1765, %v12
  %v1774 = vmul.f32 %v1766, %v13
  %v1775 = vmul.f32 %v1767, %v14
  %v1776 = vmul.f32 %v1768, %v15
  %v1777 = vmul.f32 %v1769, %v16
  %v1778 = vmul.f32 %v1770, %v17
  %v1779 = vmul.f32 %v1771, %v18
  %v1780 = vmul.f32 %v1762, %v19
  %v1781 = vmul.f32 %v1713, %v20
  %v1782 = vmul.f32 %v1715, %v21
  %v1783 = vld [vmem:[%s1 + $0x178] sm:$0xff]
  %v1784 = vld [vmem:[%s1 + $0x180] sm:$0x1]
  %v1785 = vld [vmem:[%s1 + $0x188] sm:$0xff]
  %v1786 = vld [vmem:[%s1 + $0x190] sm:$0x1]
  %1788 = vset.pattern.permute.xlu0 0
  %1789 = vperm.xlu0 %1788, %v1785
  %v1790 = vpop.permute.xlu0 %1789
  %1793 = vset.pattern.permute.xlu0 0
  %1794 = vperm.xlu0 %1793, %v1786
  %v1795 = vpop.permute.xlu0 %1794
  %v1798 = vsel %vm268, %v1783, 0
  %v1801 = vsel %vm268, %v1784, 0
  %v1804 = vsel %vm185, %v1782, 0
  %1806 = vmatprep.subr.mxu0 0.0
  %1807 = vmatpush1.msra.mxu0 %v1772
  %1808 = vmatprep.subr.mxu0 0.0
  %1809 = vmatpush1.msra.mxu0 %v1773
  %1810 = vmatprep.subr.mxu0 0.0
  %1811 = vmatpush1.msra.mxu0 %v1774
  %1812 = vmatprep.subr.mxu0 0.0
  %1813 = vmatpush1.msra.mxu0 %v1775
  %1814 = vmatprep.subr.mxu0 0.0
  %1815 = vmatpush1.msra.mxu0 %v1776
  %1816 = vmatprep.subr.mxu0 0.0
  %1817 = vmatpush1.msra.mxu0 %v1777
  %1818 = vmatprep.subr.mxu0 0.0
  %1819 = vmatpush1.msra.mxu0 %v1778
  %1820 = vmatprep.subr.mxu0 0.0
  %1821 = vmatpush1.msra.mxu0 %v1779
  %1822 = vmatprep.subr.mxu0 0.0
  %1823 = vmatpush1.msra.mxu0 %v1780
  %1824 = vmatprep.subr.mxu0 0.0
  %1825 = vmatpush1.msra.mxu0 %v1781
  %1826 = vmatprep.subr.mxu0 0.0
  %1827 = vmatpush1.msra.mxu0 %v1804
  %1828 = vmatprep.subr.mxu0 0.0
  %1829 = vmatpush1.msra.mxu0 0.0
  %1830 = vmatprep.subr.mxu0 0.0
  %1831 = vmatpush1.msra.mxu0 0.0
  %1832 = vmatprep.subr.mxu0 0.0
  %1833 = vmatpush1.msra.mxu0 0.0
  %1834 = vmatprep.subr.mxu0 0.0
  %1835 = vmatpush1.msra.mxu0 0.0
  %1836 = vmatprep.subr.mxu0 0.0
  %1837 = vmatpush1.msra.mxu0 0.0
  %1838 = vmatprep.subr.mxu0 0.0
  %1839 = vmatpush1.msra.mxu0 0.0
  %1840 = vmatprep.subr.mxu0 0.0
  %1841 = vmatpush1.msra.mxu0 0.0
  %1842 = vmatprep.subr.mxu0 0.0
  %1843 = vmatpush1.msra.mxu0 0.0
  %1844 = vmatprep.subr.mxu0 0.0
  %1845 = vmatpush1.msra.mxu0 0.0
  %1846 = vmatprep.subr.mxu0 0.0
  %1847 = vmatpush1.msra.mxu0 0.0
  %1848 = vmatprep.subr.mxu0 0.0
  %1849 = vmatpush1.msra.mxu0 0.0
  %1850 = vmatprep.subr.mxu0 0.0
  %1851 = vmatpush1.msra.mxu0 0.0
  %1852 = vmatprep.subr.mxu0 0.0
  %1853 = vmatpush1.msra.mxu0 0.0
  %1854 = vmatprep.subr.mxu0 0.0
  %1855 = vmatpush1.msra.mxu0 0.0
  %1856 = vmatprep.subr.mxu0 0.0
  %1857 = vmatpush1.msra.mxu0 0.0
  %1858 = vmatprep.subr.mxu0 0.0
  %1859 = vmatpush1.msra.mxu0 0.0
  %1860 = vmatprep.subr.mxu0 0.0
  %1861 = vmatpush1.msra.mxu0 0.0
  %1862 = vmatprep.subr.mxu0 0.0
  %1863 = vmatpush1.msra.mxu0 0.0
  %1864 = vmatprep.subr.mxu0 0.0
  %1865 = vmatpush1.msra.mxu0 0.0
  %1866 = vmatprep.subr.mxu0 0.0
  %1867 = vmatpush1.msra.mxu0 0.0
  %1868 = vmatprep.subr.mxu0 0.0
  %1869 = vmatpush1.msra.mxu0 0.0
  %1870 = vmatprep.mubr.f32.mxu0 0.0
  %1871 = vmatmul.mubr.f32.gmra.mrb[0].mxu0 %v1798
  %v1872 = vpop.f32.mrb[0].mxu0
  %v1873 = vadd.f32 %v1790, %v1872
  %v1874 = vpop.f32.mrb[0].mxu0
  %1875 = vmatprep.mubr.f32.mxu0 0.0
  %1876 = vmatmul.mubr.f32.gmra.mrb[0].mxu0 %v1801
  %v1877 = vpop.f32.mrb[0].mxu0
  %v1878 = vadd.f32 %v1795, %v1877
  %v1879 = vpop.f32.mrb[0].mxu0
  %1880 = vdwg.mxu0
  %v1881 = vmax.f32 %v1873, 0.0
  %v1882 = vmax.f32 %v1878, 0.0
  %1885 = vrot.lane.b32.xlu0 %v1881, 9
  %v1886 = vpop.permute.xlu0 %1885
  %1887 = vrot.lane.b32.xlu0 %v1882, 9
  %v1888 = vpop.permute.xlu0 %1887
  %1891 = vrot.lane.b32.xlu0 %v1881, 8
  %v1892 = vpop.permute.xlu0 %1891
  %1893 = vrot.lane.b32.xlu0 %v1882, 8
  %v1894 = vpop.permute.xlu0 %1893
  %1897 = vrot.lane.b32.xlu0 %v1881, 7
  %v1898 = vpop.permute.xlu0 %1897
  %1899 = vrot.lane.b32.xlu0 %v1882, 7
  %v1900 = vpop.permute.xlu0 %1899
  %1903 = vrot.lane.b32.xlu0 %v1881, 1
  %v1904 = vpop.permute.xlu0 %1903
  %1905 = vrot.lane.b32.xlu0 %v1882, 1
  %v1906 = vpop.permute.xlu0 %1905
  %1909 = vrot.lane.b32.xlu0 %v1881, 127
  %v1910 = vpop.permute.xlu0 %1909
  %1911 = vrot.lane.b32.xlu0 %v1882, 127
  %v1912 = vpop.permute.xlu0 %1911
  %1915 = vrot.lane.b32.xlu0 %v1881, 121
  %v1916 = vpop.permute.xlu0 %1915
  %1917 = vrot.lane.b32.xlu0 %v1882, 121
  %v1918 = vpop.permute.xlu0 %1917
  %1921 = vrot.lane.b32.xlu0 %v1881, 120
  %v1922 = vpop.permute.xlu0 %1921
  %1923 = vrot.lane.b32.xlu0 %v1882, 120
  %v1924 = vpop.permute.xlu0 %1923
  %1927 = vrot.lane.b32.xlu0 %v1881, 119
  %v1928 = vpop.permute.xlu0 %1927
  %1929 = vrot.lane.b32.xlu0 %v1882, 119
  %v1930 = vpop.permute.xlu0 %1929
  %v1935 = vrot.slane %v1892, 7
  %v1936 = vrot.slane %v1894, 7
  %v1937 = vsel %vm185, %v1935, %v1936
  %v1942 = vrot.slane %v1898, 6
  %v1943 = vrot.slane %v1900, 6
  %v1944 = vsel %vm193, %v1942, %v1943
  %v1949 = vrot.slane %v1904, 5
  %v1950 = vrot.slane %v1906, 5
  %v1951 = vsel %vm201, %v1949, %v1950
  %v1954 = vrot.slane %v1881, 4
  %v1955 = vrot.slane %v1882, 4
  %v1956 = vsel %vm207, %v1954, %v1955
  %v1961 = vrot.slane %v1910, 3
  %v1962 = vrot.slane %v1912, 3
  %v1963 = vsel %vm215, %v1961, %v1962
  %v1968 = vrot.slane %v1916, 2
  %v1969 = vrot.slane %v1918, 2
  %v1970 = vsel %vm50, %v1968, %v1969
  %v1975 = vrot.slane %v1922, 1
  %v1976 = vrot.slane %v1924, 1
  %v1977 = vsel %vm230, %v1975, %v1976
  %v1980 = vsel %vm185, %v1888, %v1935
  %v1981 = vsel %vm193, %v1937, %v1942
  %v1982 = vsel %vm201, %v1944, %v1949
  %v1983 = vsel %vm207, %v1951, %v1954
  %v1984 = vsel %vm215, %v1956, %v1961
  %v1985 = vsel %vm50, %v1963, %v1968
  %v1986 = vsel %vm230, %v1970, %v1975
  %v1987 = vmul.f32 %v1886, %v11
  %v1988 = vmul.f32 %v1980, %v12
  %v1989 = vmul.f32 %v1981, %v13
  %v1990 = vmul.f32 %v1982, %v14
  %v1991 = vmul.f32 %v1983, %v15
  %v1992 = vmul.f32 %v1984, %v16
  %v1993 = vmul.f32 %v1985, %v17
  %v1994 = vmul.f32 %v1986, %v18
  %v1995 = vmul.f32 %v1977, %v19
  %v1996 = vmul.f32 %v1928, %v20
  %v1997 = vmul.f32 %v1930, %v21
  %v1998 = vld [vmem:[%s1 + $0x198] sm:$0xff]
  %v1999 = vld [vmem:[%s1 + $0x1a0] sm:$0x1]
  %v2000 = vld [vmem:[%s1 + $0x1a8] sm:$0xff]
  %v2001 = vld [vmem:[%s1 + $0x1b0] sm:$0x1]
  %2003 = vset.pattern.permute.xlu0 0
  %2004 = vperm.xlu0 %2003, %v2000
  %v2005 = vpop.permute.xlu0 %2004
  %2008 = vset.pattern.permute.xlu0 0
  %2009 = vperm.xlu0 %2008, %v2001
  %v2010 = vpop.permute.xlu0 %2009
  %v2013 = vsel %vm268, %v1998, 0
  %v2016 = vsel %vm268, %v1999, 0
  %v2019 = vsel %vm185, %v1997, 0
  %2021 = vmatprep.subr.mxu0 0.0
  %2022 = vmatpush1.msra.mxu0 %v1987
  %2023 = vmatprep.subr.mxu0 0.0
  %2024 = vmatpush1.msra.mxu0 %v1988
  %2025 = vmatprep.subr.mxu0 0.0
  %2026 = vmatpush1.msra.mxu0 %v1989
  %2027 = vmatprep.subr.mxu0 0.0
  %2028 = vmatpush1.msra.mxu0 %v1990
  %2029 = vmatprep.subr.mxu0 0.0
  %2030 = vmatpush1.msra.mxu0 %v1991
  %2031 = vmatprep.subr.mxu0 0.0
  %2032 = vmatpush1.msra.mxu0 %v1992
  %2033 = vmatprep.subr.mxu0 0.0
  %2034 = vmatpush1.msra.mxu0 %v1993
  %2035 = vmatprep.subr.mxu0 0.0
  %2036 = vmatpush1.msra.mxu0 %v1994
  %2037 = vmatprep.subr.mxu0 0.0
  %2038 = vmatpush1.msra.mxu0 %v1995
  %2039 = vmatprep.subr.mxu0 0.0
  %2040 = vmatpush1.msra.mxu0 %v1996
  %2041 = vmatprep.subr.mxu0 0.0
  %2042 = vmatpush1.msra.mxu0 %v2019
  %2043 = vmatprep.subr.mxu0 0.0
  %2044 = vmatpush1.msra.mxu0 0.0
  %2045 = vmatprep.subr.mxu0 0.0
  %2046 = vmatpush1.msra.mxu0 0.0
  %2047 = vmatprep.subr.mxu0 0.0
  %2048 = vmatpush1.msra.mxu0 0.0
  %2049 = vmatprep.subr.mxu0 0.0
  %2050 = vmatpush1.msra.mxu0 0.0
  %2051 = vmatprep.subr.mxu0 0.0
  %2052 = vmatpush1.msra.mxu0 0.0
  %2053 = vmatprep.subr.mxu0 0.0
  %2054 = vmatpush1.msra.mxu0 0.0
  %2055 = vmatprep.subr.mxu0 0.0
  %2056 = vmatpush1.msra.mxu0 0.0
  %2057 = vmatprep.subr.mxu0 0.0
  %2058 = vmatpush1.msra.mxu0 0.0
  %2059 = vmatprep.subr.mxu0 0.0
  %2060 = vmatpush1.msra.mxu0 0.0
  %2061 = vmatprep.subr.mxu0 0.0
  %2062 = vmatpush1.msra.mxu0 0.0
  %2063 = vmatprep.subr.mxu0 0.0
  %2064 = vmatpush1.msra.mxu0 0.0
  %2065 = vmatprep.subr.mxu0 0.0
  %2066 = vmatpush1.msra.mxu0 0.0
  %2067 = vmatprep.subr.mxu0 0.0
  %2068 = vmatpush1.msra.mxu0 0.0
  %2069 = vmatprep.subr.mxu0 0.0
  %2070 = vmatpush1.msra.mxu0 0.0
  %2071 = vmatprep.subr.mxu0 0.0
  %2072 = vmatpush1.msra.mxu0 0.0
  %2073 = vmatprep.subr.mxu0 0.0
  %2074 = vmatpush1.msra.mxu0 0.0
  %2075 = vmatprep.subr.mxu0 0.0
  %2076 = vmatpush1.msra.mxu0 0.0
  %2077 = vmatprep.subr.mxu0 0.0
  %2078 = vmatpush1.msra.mxu0 0.0
  %2079 = vmatprep.subr.mxu0 0.0
  %2080 = vmatpush1.msra.mxu0 0.0
  %2081 = vmatprep.subr.mxu0 0.0
  %2082 = vmatpush1.msra.mxu0 0.0
  %2083 = vmatprep.subr.mxu0 0.0
  %2084 = vmatpush1.msra.mxu0 0.0
  %2085 = vmatprep.mubr.f32.mxu0 0.0
  %2086 = vmatmul.mubr.f32.gmra.mrb[0].mxu0 %v2013
  %v2087 = vpop.f32.mrb[0].mxu0
  %v2088 = vadd.f32 %v2005, %v2087
  %v2089 = vpop.f32.mrb[0].mxu0
  %2090 = vmatprep.mubr.f32.mxu0 0.0
  %2091 = vmatmul.mubr.f32.gmra.mrb[0].mxu0 %v2016
  %v2092 = vpop.f32.mrb[0].mxu0
  %v2093 = vadd.f32 %v2010, %v2092
  %v2094 = vpop.f32.mrb[0].mxu0
  %2095 = vdwg.mxu0
  %v2096 = vmax.f32 %v2088, 0.0
  %v2097 = vmax.f32 %v2093, 0.0
  %v2098 = vld [vmem:[%s1 + $0x1b8] sm:$0xff]
  %v2099 = vld [vmem:[%s1 + $0x1c0] sm:$0x1]
  %v2100 = vld [vmem:[%s1 + $0x1c8] sm:$0xff]
  %v2101 = vld [vmem:[%s1 + $0x1d0] sm:$0x1]
  %v2102 = vld [vmem:[%s1 + $0x1d8] sm:$0x7]
  %v2103 = vld [vmem:[%s1 + $0x1e0] sm:$0xff]
  %v2104 = vld [vmem:[%s1 + $0x1e8] sm:$0x1]
  %v2105 = vmul.f32 %v2096, %v2098
  %v2106 = vmul.f32 %v2097, %v2099
  %v2107 = vsel %vm364, %v2105, 0.0
  %2108 = vadd.xlane.f32.xlu0 %v2107
  %v2109 = vpop.xlane.xlu0 %2108
  %v2110 = vsel %vm368, %v2106, 0.0
  %2111 = vadd.xlane.f32.xlu0 %v2110
  %v2112 = vpop.xlane.xlu0 %2111
  %2115 = vrot.lane.b32.xlu0 %v2098, 64
  %v2116 = vpop.permute.xlu0 %2115
  %2117 = vrot.lane.b32.xlu0 %v2099, 64
  %v2118 = vpop.permute.xlu0 %2117
  %v2121 = vmul.f32 %v2096, %v2116
  %v2122 = vmul.f32 %v2097, %v2118
  %2125 = vrot.lane.b32.xlu0 %v2121, 64
  %v2126 = vpop.permute.xlu0 %2125
  %2127 = vrot.lane.b32.xlu0 %v2122, 64
  %v2128 = vpop.permute.xlu0 %2127
  %v2131 = vsel %vm364, %v2126, 0.0
  %2132 = vadd.xlane.f32.xlu0 %v2131
  %v2133 = vpop.xlane.xlu0 %2132
  %v2134 = vsel %vm368, %v2128, 0.0
  %2135 = vadd.xlane.f32.xlu0 %v2134
  %v2136 = vpop.xlane.xlu0 %2135
  %v2137 = vmul.f32 %v2096, %v2100
  %v2138 = vmul.f32 %v2097, %v2101
  %v2139 = vsel %vm364, %v2137, 0.0
  %2140 = vadd.xlane.f32.xlu0 %v2139
  %v2141 = vpop.xlane.xlu0 %2140
  %v2142 = vsel %vm368, %v2138, 0.0
  %2143 = vadd.xlane.f32.xlu0 %v2142
  %v2144 = vpop.xlane.xlu0 %2143
  %2147 = vrot.lane.b32.xlu0 %v2100, 64
  %v2148 = vpop.permute.xlu0 %2147
  %2149 = vrot.lane.b32.xlu0 %v2101, 64
  %v2150 = vpop.permute.xlu0 %2149
  %v2153 = vmul.f32 %v2096, %v2148
  %v2154 = vmul.f32 %v2097, %v2150
  %2157 = vrot.lane.b32.xlu0 %v2153, 64
  %v2158 = vpop.permute.xlu0 %2157
  %2159 = vrot.lane.b32.xlu0 %v2154, 64
  %v2160 = vpop.permute.xlu0 %2159
  %v2163 = vsel %vm364, %v2158, 0.0
  %2164 = vadd.xlane.f32.xlu0 %v2163
  %v2165 = vpop.xlane.xlu0 %2164
  %v2166 = vsel %vm368, %v2160, 0.0
  %2167 = vadd.xlane.f32.xlu0 %v2166
  %v2168 = vpop.xlane.xlu0 %2167
  %v2169 = vsel %vm158, %v2109, %v2133
  %v2170 = vsel %vm158, %v2112, %v2136
  %v2171 = vsel %vm430, %v2169, %v2141
  %v2172 = vsel %vm430, %v2170, %v2144
  %v2173 = vsel %vm433, %v2171, %v2165
  %v2174 = vsel %vm433, %v2172, %v2168
  %v2176 = vsel %vm139, %v2102, 0
  %v2179 = vsel %vm185, %v2174, 0
  %2181 = vmatprep.subr.mxu0 0.0
  %2182 = vmatpush1.msra.mxu0 %v2173
  %2183 = vmatprep.subr.mxu0 0.0
  %2184 = vmatpush1.msra.mxu0 %v2179
  %2185 = vmatprep.subr.mxu0 0.0
  %2186 = vmatpush1.msra.mxu0 0.0
  %2187 = vmatprep.subr.mxu0 0.0
  %2188 = vmatpush1.msra.mxu0 0.0
  %2189 = vmatprep.subr.mxu0 0.0
  %2190 = vmatpush1.msra.mxu0 0.0
  %2191 = vmatprep.subr.mxu0 0.0
  %2192 = vmatpush1.msra.mxu0 0.0
  %2193 = vmatprep.subr.mxu0 0.0
  %2194 = vmatpush1.msra.mxu0 0.0
  %2195 = vmatprep.subr.mxu0 0.0
  %2196 = vmatpush1.msra.mxu0 0.0
  %2197 = vmatprep.subr.mxu0 0.0
  %2198 = vmatpush1.msra.mxu0 0.0
  %2199 = vmatprep.subr.mxu0 0.0
  %2200 = vmatpush1.msra.mxu0 0.0
  %2201 = vmatprep.subr.mxu0 0.0
  %2202 = vmatpush1.msra.mxu0 0.0
  %2203 = vmatprep.subr.mxu0 0.0
  %2204 = vmatpush1.msra.mxu0 0.0
  %2205 = vmatprep.subr.mxu0 0.0
  %2206 = vmatpush1.msra.mxu0 0.0
  %2207 = vmatprep.subr.mxu0 0.0
  %2208 = vmatpush1.msra.mxu0 0.0
  %2209 = vmatprep.subr.mxu0 0.0
  %2210 = vmatpush1.msra.mxu0 0.0
  %2211 = vmatprep.subr.mxu0 0.0
  %2212 = vmatpush1.msra.mxu0 0.0
  %2213 = vmatprep.subr.mxu0 0.0
  %2214 = vmatpush1.msra.mxu0 0.0
  %2215 = vmatprep.subr.mxu0 0.0
  %2216 = vmatpush1.msra.mxu0 0.0
  %2217 = vmatprep.subr.mxu0 0.0
  %2218 = vmatpush1.msra.mxu0 0.0
  %2219 = vmatprep.subr.mxu0 0.0
  %2220 = vmatpush1.msra.mxu0 0.0
  %2221 = vmatprep.subr.mxu0 0.0
  %2222 = vmatpush1.msra.mxu0 0.0
  %2223 = vmatprep.subr.mxu0 0.0
  %2224 = vmatpush1.msra.mxu0 0.0
  %2225 = vmatprep.subr.mxu0 0.0
  %2226 = vmatpush1.msra.mxu0 0.0
  %2227 = vmatprep.subr.mxu0 0.0
  %2228 = vmatpush1.msra.mxu0 0.0
  %2229 = vmatprep.subr.mxu0 0.0
  %2230 = vmatpush1.msra.mxu0 0.0
  %2231 = vmatprep.subr.mxu0 0.0
  %2232 = vmatpush1.msra.mxu0 0.0
  %2233 = vmatprep.subr.mxu0 0.0
  %2234 = vmatpush1.msra.mxu0 0.0
  %2235 = vmatprep.subr.mxu0 0.0
  %2236 = vmatpush1.msra.mxu0 0.0
  %2237 = vmatprep.subr.mxu0 0.0
  %2238 = vmatpush1.msra.mxu0 0.0
  %2239 = vmatprep.subr.mxu0 0.0
  %2240 = vmatpush1.msra.mxu0 0.0
  %2241 = vmatprep.subr.mxu0 0.0
  %2242 = vmatpush1.msra.mxu0 0.0
  %2243 = vmatprep.subr.mxu0 0.0
  %2244 = vmatpush1.msra.mxu0 0.0
  %2245 = vmatprep.mubr.f32.mxu0 0.0
  %2246 = vmatmul.mubr.f32.gmra.mrb[0].mxu0 %v2176
  %v2247 = vpop.f32.mrb[0].mxu0
  %v2248 = vadd.f32 0.0, %v2247
  %v2249 = vpop.f32.mrb[0].mxu0
  %2250 = vdwg.mxu0
  %v2251 = vmax.f32 %v2248, 0.0
  %v2253 = vsel %vm433, %v2103, 0
  %v2256 = vsel %vm433, %v2104, 0
  %v2259 = vsel %vm201, %v2251, 0
  %2261 = vmatprep.subr.mxu0 0.0
  %2262 = vmatpush1.msra.mxu0 %v2259
  %2263 = vmatprep.subr.mxu0 0.0
  %2264 = vmatpush1.msra.mxu0 0.0
  %2265 = vmatprep.subr.mxu0 0.0
  %2266 = vmatpush1.msra.mxu0 0.0
  %2267 = vmatprep.subr.mxu0 0.0
  %2268 = vmatpush1.msra.mxu0 0.0
  %2269 = vmatprep.subr.mxu0 0.0
  %2270 = vmatpush1.msra.mxu0 0.0
  %2271 = vmatprep.subr.mxu0 0.0
  %2272 = vmatpush1.msra.mxu0 0.0
  %2273 = vmatprep.subr.mxu0 0.0
  %2274 = vmatpush1.msra.mxu0 0.0
  %2275 = vmatprep.subr.mxu0 0.0
  %2276 = vmatpush1.msra.mxu0 0.0
  %2277 = vmatprep.subr.mxu0 0.0
  %2278 = vmatpush1.msra.mxu0 0.0
  %2279 = vmatprep.subr.mxu0 0.0
  %2280 = vmatpush1.msra.mxu0 0.0
  %2281 = vmatprep.subr.mxu0 0.0
  %2282 = vmatpush1.msra.mxu0 0.0
  %2283 = vmatprep.subr.mxu0 0.0
  %2284 = vmatpush1.msra.mxu0 0.0
  %2285 = vmatprep.subr.mxu0 0.0
  %2286 = vmatpush1.msra.mxu0 0.0
  %2287 = vmatprep.subr.mxu0 0.0
  %2288 = vmatpush1.msra.mxu0 0.0
  %2289 = vmatprep.subr.mxu0 0.0
  %2290 = vmatpush1.msra.mxu0 0.0
  %2291 = vmatprep.subr.mxu0 0.0
  %2292 = vmatpush1.msra.mxu0 0.0
  %2293 = vmatprep.subr.mxu0 0.0
  %2294 = vmatpush1.msra.mxu0 0.0
  %2295 = vmatprep.subr.mxu0 0.0
  %2296 = vmatpush1.msra.mxu0 0.0
  %2297 = vmatprep.subr.mxu0 0.0
  %2298 = vmatpush1.msra.mxu0 0.0
  %2299 = vmatprep.subr.mxu0 0.0
  %2300 = vmatpush1.msra.mxu0 0.0
  %2301 = vmatprep.subr.mxu0 0.0
  %2302 = vmatpush1.msra.mxu0 0.0
  %2303 = vmatprep.subr.mxu0 0.0
  %2304 = vmatpush1.msra.mxu0 0.0
  %2305 = vmatprep.subr.mxu0 0.0
  %2306 = vmatpush1.msra.mxu0 0.0
  %2307 = vmatprep.subr.mxu0 0.0
  %2308 = vmatpush1.msra.mxu0 0.0
  %2309 = vmatprep.subr.mxu0 0.0
  %2310 = vmatpush1.msra.mxu0 0.0
  %2311 = vmatprep.subr.mxu0 0.0
  %2312 = vmatpush1.msra.mxu0 0.0
  %2313 = vmatprep.subr.mxu0 0.0
  %2314 = vmatpush1.msra.mxu0 0.0
  %2315 = vmatprep.subr.mxu0 0.0
  %2316 = vmatpush1.msra.mxu0 0.0
  %2317 = vmatprep.subr.mxu0 0.0
  %2318 = vmatpush1.msra.mxu0 0.0
  %2319 = vmatprep.subr.mxu0 0.0
  %2320 = vmatpush1.msra.mxu0 0.0
  %2321 = vmatprep.subr.mxu0 0.0
  %2322 = vmatpush1.msra.mxu0 0.0
  %2323 = vmatprep.subr.mxu0 0.0
  %2324 = vmatpush1.msra.mxu0 0.0
  %2325 = vmatprep.mubr.f32.mxu0 0.0
  %2326 = vmatmul.mubr.f32.gmra.mrb[0].mxu0 %v2253
  %v2327 = vpop.f32.mrb[0].mxu0
  %v2328 = vadd.f32 0.0, %v2327
  %v2329 = vpop.f32.mrb[0].mxu0
  %2330 = vmatprep.mubr.f32.mxu0 0.0
  %2331 = vmatmul.mubr.f32.gmra.mrb[0].mxu0 %v2256
  %v2332 = vpop.f32.mrb[0].mxu0
  %v2333 = vadd.f32 0.0, %v2332
  %v2334 = vpop.f32.mrb[0].mxu0
  %2335 = vdwg.mxu0
  %v2336 = vmul.f32 %v2328, 2.0
  %v2337 = vmul.f32 %v2333, 2.0
  %2340 = vrot.lane.b32.xlu0 %v2336, 126
  %v2341 = vpop.permute.xlu0 %2340
  %2342 = vrot.lane.b32.xlu0 %v2337, 126
  %v2343 = vpop.permute.xlu0 %2342
  %v2346 = vadd.f32 %v2328, %v2341
  %v2347 = vadd.f32 %v2333, %v2343
  %v2348 = vxor.u32 %v2346, 2147483648
  %v2349 = vxor.u32 %v2347, 2147483648
  %v2350 = vmul.f32 %v2348, 1.442695
  %v2351 = vpow.pop %v2350
  %v2352 = vmul.f32 %v2349, 1.442695
  %v2353 = vpow.pop %v2352
  %v2354 = vadd.f32 %v2351, 1.0
  %v2355 = vadd.f32 %v2353, 1.0
  %v2356 = vrcp.pop %v2354
  %v2357 = vmul.f32 1.0, %v2356
  %v2358 = vrcp.pop %v2355
  %v2359 = vmul.f32 1.0, %v2358
  %2361 = vset.pattern.permute.xlu0 0
  %2362 = vperm.xlu0 %2361, %v2357
  %v2363 = vpop.permute.xlu0 %2362
  %2366 = vset.pattern.permute.xlu0 0
  %2367 = vperm.xlu0 %2366, %v2359
  %v2368 = vpop.permute.xlu0 %2367
  %v2370 = vmul.f32 %v2096, %v2363
  %v2371 = vmul.f32 %v2097, %v2368
  %2372 = vset.pattern.permute.xlu0 1
  %2373 = vperm.xlu0 %2372, %v2357
  %v2374 = vpop.permute.xlu0 %2373
  %2376 = vset.pattern.permute.xlu0 1
  %2377 = vperm.xlu0 %2376, %v2359
  %v2378 = vpop.permute.xlu0 %2377
  %v2380 = vmul.f32 %v2096, %v2374
  %v2381 = vmul.f32 %v2097, %v2378
  %v2382 = vsel %vm364, %v2370, %v2380
  %v2383 = vsel %vm364, %v2371, %v2381
  %v2384 = vld [vmem:[%s1 + $0x1f0] sm:$0x1]
  %v2386 = vsel %vm139, %v2384, 0
  %v2389 = vsel %vm185, %v2383, 0
  %2391 = vmatprep.subr.mxu0 0.0
  %2392 = vmatpush1.msra.mxu0 %v2382
  %2393 = vmatprep.subr.mxu0 0.0
  %2394 = vmatpush1.msra.mxu0 %v2389
  %2395 = vmatprep.subr.mxu0 0.0
  %2396 = vmatpush1.msra.mxu0 0.0
  %2397 = vmatprep.subr.mxu0 0.0
  %2398 = vmatpush1.msra.mxu0 0.0
  %2399 = vmatprep.subr.mxu0 0.0
  %2400 = vmatpush1.msra.mxu0 0.0
  %2401 = vmatprep.subr.mxu0 0.0
  %2402 = vmatpush1.msra.mxu0 0.0
  %2403 = vmatprep.subr.mxu0 0.0
  %2404 = vmatpush1.msra.mxu0 0.0
  %2405 = vmatprep.subr.mxu0 0.0
  %2406 = vmatpush1.msra.mxu0 0.0
  %2407 = vmatprep.subr.mxu0 0.0
  %2408 = vmatpush1.msra.mxu0 0.0
  %2409 = vmatprep.subr.mxu0 0.0
  %2410 = vmatpush1.msra.mxu0 0.0
  %2411 = vmatprep.subr.mxu0 0.0
  %2412 = vmatpush1.msra.mxu0 0.0
  %2413 = vmatprep.subr.mxu0 0.0
  %2414 = vmatpush1.msra.mxu0 0.0
  %2415 = vmatprep.subr.mxu0 0.0
  %2416 = vmatpush1.msra.mxu0 0.0
  %2417 = vmatprep.subr.mxu0 0.0
  %2418 = vmatpush1.msra.mxu0 0.0
  %2419 = vmatprep.subr.mxu0 0.0
  %2420 = vmatpush1.msra.mxu0 0.0
  %2421 = vmatprep.subr.mxu0 0.0
  %2422 = vmatpush1.msra.mxu0 0.0
  %2423 = vmatprep.subr.mxu0 0.0
  %2424 = vmatpush1.msra.mxu0 0.0
  %2425 = vmatprep.subr.mxu0 0.0
  %2426 = vmatpush1.msra.mxu0 0.0
  %2427 = vmatprep.subr.mxu0 0.0
  %2428 = vmatpush1.msra.mxu0 0.0
  %2429 = vmatprep.subr.mxu0 0.0
  %2430 = vmatpush1.msra.mxu0 0.0
  %2431 = vmatprep.subr.mxu0 0.0
  %2432 = vmatpush1.msra.mxu0 0.0
  %2433 = vmatprep.subr.mxu0 0.0
  %2434 = vmatpush1.msra.mxu0 0.0
  %2435 = vmatprep.subr.mxu0 0.0
  %2436 = vmatpush1.msra.mxu0 0.0
  %2437 = vmatprep.subr.mxu0 0.0
  %2438 = vmatpush1.msra.mxu0 0.0
  %2439 = vmatprep.subr.mxu0 0.0
  %2440 = vmatpush1.msra.mxu0 0.0
  %2441 = vmatprep.subr.mxu0 0.0
  %2442 = vmatpush1.msra.mxu0 0.0
  %2443 = vmatprep.subr.mxu0 0.0
  %2444 = vmatpush1.msra.mxu0 0.0
  %2445 = vmatprep.subr.mxu0 0.0
  %2446 = vmatpush1.msra.mxu0 0.0
  %2447 = vmatprep.subr.mxu0 0.0
  %2448 = vmatpush1.msra.mxu0 0.0
  %2449 = vmatprep.subr.mxu0 0.0
  %2450 = vmatpush1.msra.mxu0 0.0
  %2451 = vmatprep.subr.mxu0 0.0
  %2452 = vmatpush1.msra.mxu0 0.0
  %2453 = vmatprep.subr.mxu0 0.0
  %2454 = vmatpush1.msra.mxu0 0.0
  %2455 = vmatprep.mubr.f32.mxu0 0.0
  %2456 = vmatmul.mubr.f32.gmra.mrb[0].mxu0 %v2386
  %v2457 = vpop.f32.mrb[0].mxu0
  %v2458 = vadd.f32 0.0, %v2457
  %v2459 = vpop.f32.mrb[0].mxu0
  %2460 = vdwg.mxu0
  %v2461 = vxor.u32 %v2458, 2147483648
  %v2462 = vmul.f32 %v2461, 1.442695
  %v2463 = vpow.pop %v2462
  %v2464 = vadd.f32 %v2463, 1.0
  %v2465 = vrcp.pop %v2464
  %v2466 = vmul.f32 1.0, %v2465
  %v2467 = vlaneseq
  %v2468 = vshrl.u32 %v2467, 7
  %v2469 = vsub.s32 0, %v2468
  %v2470 = vrot.slane %v2466, %v2469
  %v2471 = vmul.f32 %v2382, %v2470
  %v2472 = vmul.f32 %v2383, %v2470
  %v2473 = vadd.f32 %v2471, %v1666
  %v2474 = vadd.f32 %v2472, %v1667
  %2475 = vst [vmem:[%s2] sm:$0xff] %v2473
  %2476 = vst [vmem:[%s2 + $0x8] sm:$0x1] %v2474
  // Predicated region
  $region10: #{forward.1} parent=0 // pred_check
    _
  $region11: #{forward.1} parent=0 // pred_check_branch
    %2478 = sbr.rel (0) target = $region13
  $region12: #{forward.1} parent=0 // pred_region
    _
  $region13: #{forward.1} parent=0 // pred_fallthru
    _
  // Predicated region
  $region14: #{forward.1} parent=0 // pred_check
    _
  $region15: #{forward.1} parent=0 // pred_check_branch
    %2480 = sbr.rel (0) target = $region17
  $region16: #{forward.1} parent=0 // pred_region
    _
  $region17: #{forward.1} parent=0 // pred_fallthru
    _

</llo_original>
